<compile_context>
chip_gen: v5e
topology: v5e:2x2
jax: 0.10.0
libtpu: 0.0.40
codegen_flags: <defaults>
</compile_context>

<pallas_src>
import math

import jax
import jax.numpy as jnp
from jax import lax
from jax.experimental import pallas as pl
from jax.experimental.pallas import tpu as pltpu

N_HEADS = 8      # get_torch_trans(heads=8, ...)
DIM_FF = 64      # dim_feedforward=64
LN_EPS = 1e-5    # nn.LayerNorm default


def _erf_approx(x):
    # Abramowitz & Stegun 7.1.26 (max abs err ~1.5e-7): exp + polynomial only,
    # so it lowers on the VPU/EUP without relying on an erf lowering in Mosaic.
    p = 0.3275911
    a1, a2, a3, a4, a5 = (0.254829592, -0.284496736, 1.421413741,
                          -1.453152027, 1.061405429)
    s = jnp.where(x < 0.0, -1.0, 1.0)
    z = jnp.abs(x)
    t = 1.0 / (1.0 + p * z)
    poly = ((((a5 * t + a4) * t + a3) * t + a2) * t + a1) * t
    return s * (1.0 - poly * jnp.exp(-z * z))


def _gelu_erf(x):
    # matches F.gelu default (erf formulation) used by activation='gelu'
    return 0.5 * x * (1.0 + _erf_approx(x * (1.0 / math.sqrt(2.0))))


# --------------------------------------------------------------------------- #
# Kernel 1: y = x + diffusion_emb ; y = TransformerEncoderLayer(y)
# One grid step handles a C-tile (all B sequence positions of CT channels).
# --------------------------------------------------------------------------- #
def _transformer_kernel(x_ref, demb_ref, wqkv_ref, woh_ref, w1_ref, w2_ref,
                        vec_ref, y_ref):
    B, CT, E = x_ref.shape
    F = w1_ref.shape[1]
    N = B * CT
    f32 = jnp.float32
    bf16 = jnp.bfloat16

    # packed bias / LayerNorm rows (one padded f32 slab instead of 10 inputs)
    vecs = vec_ref[...]
    bqkv = vecs[0:1, :3 * E]
    bo, ln1w, ln1b = vecs[1:2, :E], vecs[2:3, :E], vecs[3:4, :E]
    b1 = vecs[4:5, :F]
    b2, ln2w, ln2b = vecs[5:6, :E], vecs[6:7, :E], vecs[7:8, :E]

    woh = woh_ref[...]
    hh, wo = woh[:E, :], woh[E:, :]          # head-membership matrix | Wo^T

    # y = x + diffusion projection (broadcast over L); flatten block to tokens.
    y2 = (x_ref[...] + demb_ref[...]).reshape(N, E)        # (N, E) f32
    yb = y2.astype(bf16)

    # Fused Q/K/V projection: ONE (N, E) x (E, 3E) bf16 matmul (f32 accum);
    # the 1/sqrt(Dh) softmax scale is already folded into the Q columns + bias.
    qkv = jnp.dot(yb, wqkv_ref[...], preferred_element_type=f32) + bqkv
    q3 = qkv[:, :E].reshape(B, CT, E)
    k3 = qkv[:, E:2 * E].reshape(B, CT, E)
    v3 = qkv[:, 2 * E:].reshape(B, CT, E)

    # Online-softmax attention over the sequence axis B (batch axis = channels):
    # only the running (m, den, acc) stay live; k_j / v_j broadcast over the
    # leading B axis (no tiles, no O(B) live temporaries).
    m = jnp.full((B, CT, E), -jnp.inf, f32)
    den = jnp.zeros((B, CT, E), f32)
    acc = jnp.zeros((B, CT, E), f32)
    for j in range(B):                                      # short static seq
        k_j = k3[j]                                         # (CT, E) broadcasts
        v_j = v3[j]
        # per-head scores replicated across each head's Dh lanes, via the
        # precomputed block-diagonal hh: one (N, E) x (E, E) matmul per key.
        s = jnp.dot((q3 * k_j).reshape(N, E).astype(bf16), hh,
                    preferred_element_type=f32).reshape(B, CT, E)
        m_new = jnp.maximum(m, s)
        alpha = jnp.exp(m - m_new)
        p = jnp.exp(s - m_new)
        den = den * alpha + p
        acc = acc * alpha + p * v_j
        m = m_new
    attn = acc * pl.reciprocal(den, approx=False)           # EUP reciprocal
    attn = jnp.dot(attn.reshape(N, E).astype(bf16), wo,
                   preferred_element_type=f32) + bo

    # add & LayerNorm 1 (f32)
    h1 = y2 + attn
    mu1 = jnp.mean(h1, axis=-1, keepdims=True)
    d1 = h1 - mu1
    var1 = jnp.mean(d1 * d1, axis=-1, keepdims=True)
    h1n = d1 * lax.rsqrt(var1 + LN_EPS) * ln1w + ln1b

    # feed-forward (erf gelu) + add & LayerNorm 2
    ff = jnp.dot(h1n.astype(bf16), w1_ref[...], preferred_element_type=f32) + b1
    ff = _gelu_erf(ff)
    ff = jnp.dot(ff.astype(bf16), w2_ref[...], preferred_element_type=f32) + b2
    h2 = h1n + ff
    mu2 = jnp.mean(h2, axis=-1, keepdims=True)
    d2 = h2 - mu2
    var2 = jnp.mean(d2 * d2, axis=-1, keepdims=True)
    y_tr = d2 * lax.rsqrt(var2 + LN_EPS) * ln2w + ln2b

    # bf16 handoff to the conv1x1 tail (it feeds the MXU in bf16 anyway)
    y_ref[...] = y_tr.reshape(B, CT, E).astype(y_ref.dtype)


# --------------------------------------------------------------------------- #
# Kernel 2: fused conv1x1 tail on channel-major (., TL) slabs (one batch b per
# grid step via squeezed BlockSpec dims -> no transposes anywhere).
#   z   = Wmid@y + Wst@ST + Wuser@user + (bmid+bst+buser)
#   act = sigmoid(z[:C]) * tanh(z[C:]);  o = Wout@act + bout
#   res = (x + o[:C]) / sqrt(2);  skip = o[C:]
# --------------------------------------------------------------------------- #
def _tail_kernel(y_ref, st_ref, user_ref, x_ref,
                 wmid_ref, wstu_ref, wout_ref, bias_ref,
                 res_ref, skip_ref):
    C = x_ref.shape[0]
    cond = st_ref.shape[0]
    f32 = jnp.float32
    bf16 = jnp.bfloat16

    bias = bias_ref[...]
    bz, bout = bias[:, 0:1], bias[:, 1:2]
    wstu = wstu_ref[...]
    wst, wuser = wstu[:, :cond], wstu[:, cond:]

    # accumulated dots (no in-kernel concatenate)
    z = jnp.dot(wmid_ref[...], y_ref[...], preferred_element_type=f32)
    z = z + jnp.dot(wst, st_ref[...].astype(bf16), preferred_element_type=f32)
    z = z + jnp.dot(wuser, user_ref[...].astype(bf16), preferred_element_type=f32)
    z = z + bz

    act = jax.nn.sigmoid(z[:C, :]) * jnp.tanh(z[C:, :])     # f32 gating
    o = jnp.dot(wout_ref[...], act.astype(bf16), preferred_element_type=f32) + bout
    res_ref[...] = (x_ref[...] + o[:C, :]) * (1.0 / math.sqrt(2.0))
    skip_ref[...] = o[C:, :]


# --------------------------------------------------------------------------- #
# Parameters
# --------------------------------------------------------------------------- #
def init_params(key, channels, cond_dim, diff_dim):
    """Deterministic synthetic parameters with the same shapes as the torch module."""
    C = channels
    E = C                      # d_model == channels (requires L == channels)
    F = DIM_FF
    keys = iter(jax.random.split(key, 24))

    def nrm(shape, scale):
        return (scale * jax.random.normal(next(keys), shape)).astype(jnp.float32)

    return {
        # diffusion_projection: nn.Linear(diff_dim, C)
        "Wdp": nrm((C, diff_dim), 1.0 / math.sqrt(diff_dim)), "bdp": nrm((C,), 0.02),
        # MultiheadAttention in_proj split into q/k/v, and out_proj
        "Wq": nrm((E, E), 1.0 / math.sqrt(E)), "bq": nrm((E,), 0.02),
        "Wk": nrm((E, E), 1.0 / math.sqrt(E)), "bk": nrm((E,), 0.02),
        "Wv": nrm((E, E), 1.0 / math.sqrt(E)), "bv": nrm((E,), 0.02),
        "Wo": nrm((E, E), 1.0 / math.sqrt(E)), "bo": nrm((E,), 0.02),
        "ln1w": jnp.ones((E,), jnp.float32), "ln1b": jnp.zeros((E,), jnp.float32),
        # feed-forward: Linear(E, 64), Linear(64, E)
        "W1": nrm((F, E), 1.0 / math.sqrt(E)), "b1": nrm((F,), 0.02),
        "W2": nrm((E, F), 1.0 / math.sqrt(F)), "b2": nrm((E,), 0.02),
        "ln2w": jnp.ones((E,), jnp.float32), "ln2b": jnp.zeros((E,), jnp.float32),
        # Conv1d(kernel_size=1) weights stored as (out, in)
        "Wmid": nrm((2 * C, C), math.sqrt(2.0 / C)), "bmid": nrm((2 * C,), 0.02),
        "Wst": nrm((2 * C, cond_dim), math.sqrt(2.0 / cond_dim)), "bst": nrm((2 * C,), 0.02),
        "Wuser": nrm((2 * C, cond_dim), math.sqrt(2.0 / cond_dim)), "buser": nrm((2 * C,), 0.02),
        "Wout": nrm((2 * C, C), math.sqrt(2.0 / C)), "bout": nrm((2 * C,), 0.02),
    }


def pack_params(p):
    """One-time conversion to kernel layouts: fused QKV (with folded 1/sqrt(Dh)),
    hoisted head-membership matrix, packed bias/LN slab, bf16 casts, fused tail bias."""
    bf16 = jnp.bfloat16
    f32 = jnp.float32
    E = p["Wq"].shape[0]
    F = p["W1"].shape[0]
    Dh = E // N_HEADS
    scale = 1.0 / math.sqrt(Dh)

    # fused QKV weight (E, 3E); softmax scale folded into the Q columns
    wqkv = jnp.concatenate([p["Wq"].T * scale, p["Wk"].T, p["Wv"].T],
                           axis=1).astype(bf16)

    # block-diagonal head-membership matrix, hoisted out of the kernel
    head = jnp.arange(E) // Dh
    hh = (head[:, None] == head[None, :]).astype(f32)
    woh = jnp.concatenate([hh, p["Wo"].T], axis=0).astype(bf16)      # (2E, E)

    # all 1-D bias / LayerNorm params packed into one padded f32 row-slab
    W = max(3 * E, F)

    def row(v):
        v = jnp.asarray(v, f32).reshape(1, -1)
        return jnp.pad(v, ((0, 0), (0, W - v.shape[1])))

    vecs = jnp.concatenate([
        row(jnp.concatenate([p["bq"] * scale, p["bk"], p["bv"]])),
        row(p["bo"]), row(p["ln1w"]), row(p["ln1b"]),
        row(p["b1"]), row(p["b2"]), row(p["ln2w"]), row(p["ln2b"]),
    ], axis=0)                                                       # (8, W)

    return {
        "wdpT": p["Wdp"].T.astype(f32), "bdp": p["bdp"].reshape(1, -1).astype(f32),
        "wqkv": wqkv, "woh": woh,
        "w1": p["W1"].T.astype(bf16), "w2": p["W2"].T.astype(bf16),
        "vecs": vecs,
        # conv1x1 tail: ST/user weights packed; gate bias pre-summed
        # (the torch forward always sums all three conv outputs before the gate)
        "wmid": p["Wmid"].astype(bf16),
        "wstu": jnp.concatenate([p["Wst"], p["Wuser"]], axis=1).astype(bf16),
        "wout": p["Wout"].astype(bf16),
        "bias2": jnp.stack([p["bmid"] + p["bst"] + p["buser"], p["bout"]],
                           axis=1).astype(f32),                      # (2C, 2)
    }


# --------------------------------------------------------------------------- #
# Wrapper
# --------------------------------------------------------------------------- #
def _whole_spec(arr, n_grid):
    """BlockSpec that passes the full array (weights) to every grid step."""
    zeros = (0,) * arr.ndim
    if n_grid == 1:
        return pl.BlockSpec(arr.shape, lambda i: zeros)
    return pl.BlockSpec(arr.shape, lambda i, j: zeros)


def _choose_c_tile(C):
    # grid=1 for small C (single-TensorCore v5e/v6e would only pay per-step
    # overhead for a split); larger C -> <=128-channel parallel tiles (v7x cores).
    if C <= 128:
        return C
    for ct in (128, 64, 32, 16, 8):
        if C % ct == 0:
            return ct
    return C


def _choose_l_tile(L):
    # the tail's lane axis; keep the whole L unless it is huge.
    if L <= 2048:
        return L
    for tl in (2048, 1024, 512, 256, 128):
        if L % tl == 0:
            return tl
    return L


def residual_block_forward(kp, x, user_info, st_info, diff_emb):
    B, C, L = x.shape
    assert L == C, "TransformerEncoder(d_model=channels) requires L == channels"
    assert C % N_HEADS == 0
    E = L
    cond = user_info.shape[1]
    f32 = jnp.float32

    # diffusion_projection(diffusion_emb).unsqueeze(-1): tiny (B, diff_dim)
    # Linear evaluated in the wrapper, handed to kernel 1 as a (B, C, 1) bias.
    demb = (jnp.dot(diff_emb, kp["wdpT"]) + kp["bdp"])[:, :, None]

    # ---- kernel 1: diffusion add + TransformerEncoder layer (grid over C) ----
    CT = _choose_c_tile(C)
    y = pl.pallas_call(
        _transformer_kernel,
        grid=(C // CT,),
        in_specs=[pl.BlockSpec((B, CT, E), lambda i: (0, i, 0)),
                  pl.BlockSpec((B, CT, 1), lambda i: (0, i, 0)),
                  _whole_spec(kp["wqkv"], 1), _whole_spec(kp["woh"], 1),
                  _whole_spec(kp["w1"], 1), _whole_spec(kp["w2"], 1),
                  _whole_spec(kp["vecs"], 1)],
        out_specs=pl.BlockSpec((B, CT, E), lambda i: (0, i, 0)),
        out_shape=jax.ShapeDtypeStruct((B, C, E), jnp.bfloat16),
        compiler_params=pltpu.CompilerParams(
            dimension_semantics=("parallel",)),
    )(x, demb, kp["wqkv"], kp["woh"], kp["w1"], kp["w2"], kp["vecs"])

    # ---- kernel 2: conv1x1 tail, grid over (B, L-tiles); squeezed batch dim
    # yields channel-major slabs directly (no transposes in wrapper or kernel) ----
    TL = _choose_l_tile(L)
    res, skip = pl.pallas_call(
        _tail_kernel,
        grid=(B, L // TL),
        in_specs=[pl.BlockSpec((None, C, TL), lambda b, l: (b, 0, l)),      # y (bf16)
                  pl.BlockSpec((None, cond, TL), lambda b, l: (b, 0, l)),   # ST_info
                  pl.BlockSpec((None, cond, TL), lambda b, l: (b, 0, l)),   # user_info
                  pl.BlockSpec((None, C, TL), lambda b, l: (b, 0, l)),      # x
                  _whole_spec(kp["wmid"], 2), _whole_spec(kp["wstu"], 2),
                  _whole_spec(kp["wout"], 2), _whole_spec(kp["bias2"], 2)],
        out_specs=(pl.BlockSpec((None, C, TL), lambda b, l: (b, 0, l)),
                   pl.BlockSpec((None, C, TL), lambda b, l: (b, 0, l))),
        out_shape=(jax.ShapeDtypeStruct((B, C, L), f32),
                   jax.ShapeDtypeStruct((B, C, L), f32)),
        compiler_params=pltpu.CompilerParams(
            dimension_semantics=("parallel", "parallel")),
    )(y, st_info, user_info, x,
      kp["wmid"], kp["wstu"], kp["wout"], kp["bias2"])
    return res, skip


# --------------------------------------------------------------------------- #
# Pure-JAX reference of ResidualBlock.forward (eval mode), mimicking the
# kernels' bf16 rounding of matmul operands so parity can be checked tightly.
# --------------------------------------------------------------------------- #
def reference_forward(p, x, user_info, st_info, diff_emb):
    f32 = jnp.float32
    rq = lambda a: a.astype(jnp.bfloat16).astype(f32)
    B, C, L = x.shape
    E, H = L, N_HEADS
    Dh = E // H
    sc = 1.0 / math.sqrt(Dh)

    demb = diff_emb @ p["Wdp"].T + p["bdp"]
    y = x + demb[:, :, None]                               # (seq=B, batch=C, E)

    q = (rq(y) @ rq(p["Wq"].T) + p["bq"]) * sc
    k = rq(y) @ rq(p["Wk"].T) + p["bk"]
    v = rq(y) @ rq(p["Wv"].T) + p["bv"]
    qh = q.reshape(B, C, H, Dh)
    kh = k.reshape(B, C, H, Dh)
    vh = v.reshape(B, C, H, Dh)
    prod = rq(qh[:, None] * kh[None])                      # (Bq, Bk, C, H, Dh)
    s = prod.sum(-1)                                       # (Bq, Bk, C, H)
    pw = jax.nn.softmax(s, axis=1)
    attn = jnp.einsum("ijch,jchd->ichd", pw, vh).reshape(B, C, E)
    attn = rq(attn) @ rq(p["Wo"].T) + p["bo"]

    def ln(a, w, b):
        mu = jnp.mean(a, -1, keepdims=True)
        var = jnp.mean((a - mu) ** 2, -1, keepdims=True)
        return (a - mu) * lax.rsqrt(var + LN_EPS) * w + b

    h1 = ln(y + attn, p["ln1w"], p["ln1b"])
    ff = rq(h1) @ rq(p["W1"].T) + p["b1"]
    ff = 0.5 * ff * (1.0 + lax.erf(ff / math.sqrt(2.0)))
    ff = rq(ff) @ rq(p["W2"].T) + p["b2"]
    y_tr = rq(ln(h1 + ff, p["ln2w"], p["ln2b"]))           # bf16 handoff mimic

    def conv(w, a):                                        # Conv1d(k=1): (O,I)x(B,I,L)
        return jnp.einsum("oc,bcl->bol", rq(w), a)

    z = conv(p["Wmid"], y_tr) + conv(p["Wst"], rq(st_info)) + conv(p["Wuser"], rq(user_info))
    z = z + (p["bmid"] + p["bst"] + p["buser"])[None, :, None]
    act = jax.nn.sigmoid(z[:, :C]) * jnp.tanh(z[:, C:])
    o = conv(p["Wout"], rq(act)) + p["bout"][None, :, None]
    return (x + o[:, :C]) / math.sqrt(2.0), o[:, C:]


if __name__ == "__main__":
    # small shapes: channels = L = 32 (d_model=32, 8 heads, head_dim=4), batch=2
    B, C, L = 2, 32, 32
    cond_dim, diff_dim = 16, 16

    key = jax.random.PRNGKey(0)
    kx, ku, kst, kd, kparam = jax.random.split(key, 5)
    x = jax.random.normal(kx, (B, C, L), jnp.float32)
    user_info = jax.random.normal(ku, (B, cond_dim, L), jnp.float32)
    st_info = jax.random.normal(kst, (B, cond_dim, L), jnp.float32)
    diff_emb = jax.random.normal(kd, (B, diff_dim), jnp.float32)

    params = init_params(kparam, C, cond_dim, diff_dim)
    kparams = pack_params(params)

    fwd = jax.jit(residual_block_forward)
    res, skip = fwd(kparams, x, user_info, st_info, diff_emb)
    jax.block_until_ready((res, skip))

    assert res.shape == (B, C, L) and skip.shape == (B, C, L)
    assert bool(jnp.isfinite(res).all()) and bool(jnp.isfinite(skip).all())

    # parity against the pure-JAX reference of the same forward pass
    res_ref, skip_ref = reference_forward(params, x, user_info, st_info, diff_emb)
    err = max(float(jnp.max(jnp.abs(res - res_ref))),
              float(jnp.max(jnp.abs(skip - skip_ref))))
    assert err < 2e-2, f"parity error {err}"
    print("KERNEL_OK")
</pallas_src>

<mosaic_0001>
module attributes {stable_mosaic.version = 11 : i64} {
  func.func @_transformer_kernel(%arg0: i32, %arg1: memref<2x32x32xf32, #tpu.memory_space<vmem>>, %arg2: memref<2x32x1xf32, #tpu.memory_space<vmem>>, %arg3: memref<32x96xbf16, #tpu.memory_space<vmem>>, %arg4: memref<64x32xbf16, #tpu.memory_space<vmem>>, %arg5: memref<32x64xbf16, #tpu.memory_space<vmem>>, %arg6: memref<64x32xbf16, #tpu.memory_space<vmem>>, %arg7: memref<8x96xf32, #tpu.memory_space<vmem>>, %arg8: memref<2x32x32xbf16, #tpu.memory_space<vmem>>) attributes {dimension_semantics = [#tpu.dimension_semantics<parallel>], iteration_bounds = array<i64: 1>, scalar_prefetch = 0 : i64, scratch_operands = 0 : i64, tpu.core_type = #tpu.core_type<tc>, window_params = [{transform_indices = @transform_0, window_bounds = array<i64: 2, 32, 32>}, {transform_indices = @transform_1, window_bounds = array<i64: 2, 32, 1>}, {pipeline_mode = #tpu.pipeline_mode<synchronous>, transform_indices = @transform_2, window_bounds = array<i64: 32, 96>}, {pipeline_mode = #tpu.pipeline_mode<synchronous>, transform_indices = @transform_3, window_bounds = array<i64: 64, 32>}, {pipeline_mode = #tpu.pipeline_mode<synchronous>, transform_indices = @transform_4, window_bounds = array<i64: 32, 64>}, {pipeline_mode = #tpu.pipeline_mode<synchronous>, transform_indices = @transform_5, window_bounds = array<i64: 64, 32>}, {pipeline_mode = #tpu.pipeline_mode<synchronous>, transform_indices = @transform_6, window_bounds = array<i64: 8, 96>}, {transform_indices = @transform_7, window_bounds = array<i64: 2, 32, 32>}]} {
    %c0 = arith.constant 0 : index
    %c0_0 = arith.constant 0 : index
    %0 = vector.load %arg7[%c0, %c0_0] : memref<8x96xf32, #tpu.memory_space<vmem>>, vector<8x96xf32>
    %1 = vector.extract_strided_slice %0 {offsets = [0, 0], sizes = [1, 96], strides = [1, 1]} : vector<8x96xf32> to vector<1x96xf32>
    %2 = vector.extract_strided_slice %0 {offsets = [1, 0], sizes = [1, 32], strides = [1, 1]} : vector<8x96xf32> to vector<1x32xf32>
    %3 = vector.extract_strided_slice %0 {offsets = [2, 0], sizes = [1, 32], strides = [1, 1]} : vector<8x96xf32> to vector<1x32xf32>
    %4 = vector.extract_strided_slice %0 {offsets = [3, 0], sizes = [1, 32], strides = [1, 1]} : vector<8x96xf32> to vector<1x32xf32>
    %5 = vector.extract_strided_slice %0 {offsets = [4, 0], sizes = [1, 64], strides = [1, 1]} : vector<8x96xf32> to vector<1x64xf32>
    %6 = vector.extract_strided_slice %0 {offsets = [5, 0], sizes = [1, 32], strides = [1, 1]} : vector<8x96xf32> to vector<1x32xf32>
    %7 = vector.extract_strided_slice %0 {offsets = [6, 0], sizes = [1, 32], strides = [1, 1]} : vector<8x96xf32> to vector<1x32xf32>
    %8 = vector.extract_strided_slice %0 {offsets = [7, 0], sizes = [1, 32], strides = [1, 1]} : vector<8x96xf32> to vector<1x32xf32>
    %c0_1 = arith.constant 0 : index
    %c0_2 = arith.constant 0 : index
    %9 = vector.load %arg4[%c0_1, %c0_2] : memref<64x32xbf16, #tpu.memory_space<vmem>>, vector<64x32xbf16>
    %10 = vector.extract_strided_slice %9 {offsets = [0, 0], sizes = [32, 32], strides = [1, 1]} : vector<64x32xbf16> to vector<32x32xbf16>
    %11 = vector.extract_strided_slice %9 {offsets = [32, 0], sizes = [32, 32], strides = [1, 1]} : vector<64x32xbf16> to vector<32x32xbf16>
    %c0_3 = arith.constant 0 : index
    %c0_4 = arith.constant 0 : index
    %c0_5 = arith.constant 0 : index
    %12 = vector.load %arg1[%c0_3, %c0_4, %c0_5] : memref<2x32x32xf32, #tpu.memory_space<vmem>>, vector<2x32x32xf32>
    %c0_6 = arith.constant 0 : index
    %c0_7 = arith.constant 0 : index
    %c0_8 = arith.constant 0 : index
    %13 = vector.load %arg2[%c0_6, %c0_7, %c0_8] : memref<2x32x1xf32, #tpu.memory_space<vmem>>, vector<2x32x1xf32>
    %14 = vector.broadcast %13 : vector<2x32x1xf32> to vector<2x32x32xf32>
    %15 = arith.addf %12, %14 : vector<2x32x32xf32>
    %16 = vector.shape_cast %15 : vector<2x32x32xf32> to vector<64x32xf32>
    %17 = arith.truncf %16 : vector<64x32xf32> to vector<64x32xbf16>
    %c0_9 = arith.constant 0 : index
    %c0_10 = arith.constant 0 : index
    %18 = vector.load %arg3[%c0_9, %c0_10] : memref<32x96xbf16, #tpu.memory_space<vmem>>, vector<32x96xbf16>
    %cst = arith.constant dense<0.000000e+00> : vector<64x96xf32>
    %19 = tpu.matmul %17, %18, %cst {dimension_numbers = #tpu.dot_dimension_numbers<[1], [0], [0], [1], [0, 0, 1, 1], [], []>} : vector<64x32xbf16>, vector<32x96xbf16>, vector<64x96xf32> -> vector<64x96xf32>
    %20 = vector.broadcast %1 : vector<1x96xf32> to vector<64x96xf32>
    %21 = arith.addf %19, %20 : vector<64x96xf32>
    %22 = vector.extract_strided_slice %21 {offsets = [0, 0], sizes = [64, 32], strides = [1, 1]} : vector<64x96xf32> to vector<64x32xf32>
    %23 = vector.shape_cast %22 : vector<64x32xf32> to vector<2x32x32xf32>
    %24 = vector.extract_strided_slice %21 {offsets = [0, 32], sizes = [64, 32], strides = [1, 1]} : vector<64x96xf32> to vector<64x32xf32>
    %25 = vector.shape_cast %24 : vector<64x32xf32> to vector<2x32x32xf32>
    %26 = vector.extract_strided_slice %21 {offsets = [0, 64], sizes = [64, 32], strides = [1, 1]} : vector<64x96xf32> to vector<64x32xf32>
    %27 = vector.shape_cast %26 : vector<64x32xf32> to vector<2x32x32xf32>
    %cst_11 = arith.constant 0xFF800000 : f32
    %28 = vector.broadcast %cst_11 : f32 to vector<2x32x32xf32>
    %cst_12 = arith.constant 0.000000e+00 : f32
    %29 = vector.broadcast %cst_12 : f32 to vector<2x32x32xf32>
    %cst_13 = arith.constant 0.000000e+00 : f32
    %30 = vector.broadcast %cst_13 : f32 to vector<2x32x32xf32>
    %31 = vector.extract_strided_slice %25 {offsets = [0, 0, 0], sizes = [1, 32, 32], strides = [1, 1, 1]} : vector<2x32x32xf32> to vector<1x32x32xf32>
    %32 = vector.shape_cast %31 : vector<1x32x32xf32> to vector<32x32xf32>
    %33 = vector.extract_strided_slice %27 {offsets = [0, 0, 0], sizes = [1, 32, 32], strides = [1, 1, 1]} : vector<2x32x32xf32> to vector<1x32x32xf32>
    %34 = vector.shape_cast %33 : vector<1x32x32xf32> to vector<32x32xf32>
    %35 = vector.shape_cast %32 : vector<32x32xf32> to vector<1x32x32xf32>
    %36 = vector.broadcast %35 : vector<1x32x32xf32> to vector<2x32x32xf32>
    %37 = arith.mulf %23, %36 : vector<2x32x32xf32>
    %38 = vector.shape_cast %37 : vector<2x32x32xf32> to vector<64x32xf32>
    %39 = arith.truncf %38 : vector<64x32xf32> to vector<64x32xbf16>
    %cst_14 = arith.constant dense<0.000000e+00> : vector<64x32xf32>
    %40 = tpu.matmul %39, %10, %cst_14 {dimension_numbers = #tpu.dot_dimension_numbers<[1], [0], [0], [1], [0, 0, 1, 1], [], []>} : vector<64x32xbf16>, vector<32x32xbf16>, vector<64x32xf32> -> vector<64x32xf32>
    %41 = vector.shape_cast %40 : vector<64x32xf32> to vector<2x32x32xf32>
    %42 = arith.maximumf %28, %41 : vector<2x32x32xf32>
    %43 = arith.subf %28, %42 : vector<2x32x32xf32>
    %44 = math.exp %43 : vector<2x32x32xf32>
    %45 = arith.subf %41, %42 : vector<2x32x32xf32>
    %46 = math.exp %45 : vector<2x32x32xf32>
    %47 = arith.mulf %29, %44 : vector<2x32x32xf32>
    %48 = arith.addf %47, %46 : vector<2x32x32xf32>
    %49 = arith.mulf %30, %44 : vector<2x32x32xf32>
    %50 = vector.shape_cast %34 : vector<32x32xf32> to vector<1x32x32xf32>
    %51 = vector.broadcast %50 : vector<1x32x32xf32> to vector<2x32x32xf32>
    %52 = arith.mulf %46, %51 : vector<2x32x32xf32>
    %53 = arith.addf %49, %52 : vector<2x32x32xf32>
    %54 = vector.extract_strided_slice %25 {offsets = [1, 0, 0], sizes = [1, 32, 32], strides = [1, 1, 1]} : vector<2x32x32xf32> to vector<1x32x32xf32>
    %55 = vector.shape_cast %54 : vector<1x32x32xf32> to vector<32x32xf32>
    %56 = vector.extract_strided_slice %27 {offsets = [1, 0, 0], sizes = [1, 32, 32], strides = [1, 1, 1]} : vector<2x32x32xf32> to vector<1x32x32xf32>
    %57 = vector.shape_cast %56 : vector<1x32x32xf32> to vector<32x32xf32>
    %58 = vector.shape_cast %55 : vector<32x32xf32> to vector<1x32x32xf32>
    %59 = vector.broadcast %58 : vector<1x32x32xf32> to vector<2x32x32xf32>
    %60 = arith.mulf %23, %59 : vector<2x32x32xf32>
    %61 = vector.shape_cast %60 : vector<2x32x32xf32> to vector<64x32xf32>
    %62 = arith.truncf %61 : vector<64x32xf32> to vector<64x32xbf16>
    %cst_15 = arith.constant dense<0.000000e+00> : vector<64x32xf32>
    %63 = tpu.matmul %62, %10, %cst_15 {dimension_numbers = #tpu.dot_dimension_numbers<[1], [0], [0], [1], [0, 0, 1, 1], [], []>} : vector<64x32xbf16>, vector<32x32xbf16>, vector<64x32xf32> -> vector<64x32xf32>
    %64 = vector.shape_cast %63 : vector<64x32xf32> to vector<2x32x32xf32>
    %65 = arith.maximumf %42, %64 : vector<2x32x32xf32>
    %66 = arith.subf %42, %65 : vector<2x32x32xf32>
    %67 = math.exp %66 : vector<2x32x32xf32>
    %68 = arith.subf %64, %65 : vector<2x32x32xf32>
    %69 = math.exp %68 : vector<2x32x32xf32>
    %70 = arith.mulf %48, %67 : vector<2x32x32xf32>
    %71 = arith.addf %70, %69 : vector<2x32x32xf32>
    %72 = arith.mulf %53, %67 : vector<2x32x32xf32>
    %73 = vector.shape_cast %57 : vector<32x32xf32> to vector<1x32x32xf32>
    %74 = vector.broadcast %73 : vector<1x32x32xf32> to vector<2x32x32xf32>
    %75 = arith.mulf %69, %74 : vector<2x32x32xf32>
    %76 = arith.addf %72, %75 : vector<2x32x32xf32>
    %77 = tpu.reciprocal %71 : vector<2x32x32xf32> -> vector<2x32x32xf32>
    %78 = arith.mulf %76, %77 : vector<2x32x32xf32>
    %79 = vector.shape_cast %78 : vector<2x32x32xf32> to vector<64x32xf32>
    %80 = arith.truncf %79 : vector<64x32xf32> to vector<64x32xbf16>
    %cst_16 = arith.constant dense<0.000000e+00> : vector<64x32xf32>
    %81 = tpu.matmul %80, %11, %cst_16 {dimension_numbers = #tpu.dot_dimension_numbers<[1], [0], [0], [1], [0, 0, 1, 1], [], []>} : vector<64x32xbf16>, vector<32x32xbf16>, vector<64x32xf32> -> vector<64x32xf32>
    %82 = vector.broadcast %2 : vector<1x32xf32> to vector<64x32xf32>
    %83 = arith.addf %81, %82 : vector<64x32xf32>
    %84 = arith.addf %16, %83 : vector<64x32xf32>
    %cst_17 = arith.constant dense<0.000000e+00> : vector<64xf32>
    %85 = vector.multi_reduction <add>, %84, %cst_17 [1] : vector<64x32xf32> to vector<64xf32>
    %86 = vector.shape_cast %85 : vector<64xf32> to vector<64x1xf32>
    %cst_18 = arith.constant 3.200000e+01 : f32
    %87 = vector.broadcast %cst_18 : f32 to vector<64x1xf32>
    %88 = arith.divf %86, %87 : vector<64x1xf32>
    %89 = vector.broadcast %88 : vector<64x1xf32> to vector<64x32xf32>
    %90 = arith.subf %84, %89 : vector<64x32xf32>
    %91 = arith.mulf %90, %90 : vector<64x32xf32>
    %cst_19 = arith.constant dense<0.000000e+00> : vector<64xf32>
    %92 = vector.multi_reduction <add>, %91, %cst_19 [1] : vector<64x32xf32> to vector<64xf32>
    %93 = vector.shape_cast %92 : vector<64xf32> to vector<64x1xf32>
    %cst_20 = arith.constant 3.200000e+01 : f32
    %94 = vector.broadcast %cst_20 : f32 to vector<64x1xf32>
    %95 = arith.divf %93, %94 : vector<64x1xf32>
    %cst_21 = arith.constant 9.99999974E-6 : f32
    %96 = vector.broadcast %cst_21 : f32 to vector<64x1xf32>
    %97 = arith.addf %95, %96 : vector<64x1xf32>
    %98 = math.rsqrt %97 : vector<64x1xf32>
    %99 = vector.broadcast %98 : vector<64x1xf32> to vector<64x32xf32>
    %100 = arith.mulf %90, %99 : vector<64x32xf32>
    %101 = vector.broadcast %3 : vector<1x32xf32> to vector<64x32xf32>
    %102 = arith.mulf %100, %101 : vector<64x32xf32>
    %103 = vector.broadcast %4 : vector<1x32xf32> to vector<64x32xf32>
    %104 = arith.addf %102, %103 : vector<64x32xf32>
    %105 = arith.truncf %104 : vector<64x32xf32> to vector<64x32xbf16>
    %c0_22 = arith.constant 0 : index
    %c0_23 = arith.constant 0 : index
    %106 = vector.load %arg5[%c0_22, %c0_23] : memref<32x64xbf16, #tpu.memory_space<vmem>>, vector<32x64xbf16>
    %cst_24 = arith.constant dense<0.000000e+00> : vector<64x64xf32>
    %107 = tpu.matmul %105, %106, %cst_24 {dimension_numbers = #tpu.dot_dimension_numbers<[1], [0], [0], [1], [0, 0, 1, 1], [], []>} : vector<64x32xbf16>, vector<32x64xbf16>, vector<64x64xf32> -> vector<64x64xf32>
    %108 = vector.broadcast %5 : vector<1x64xf32> to vector<64x64xf32>
    %109 = arith.addf %107, %108 : vector<64x64xf32>
    %cst_25 = arith.constant 5.000000e-01 : f32
    %110 = vector.broadcast %cst_25 : f32 to vector<64x64xf32>
    %111 = arith.mulf %110, %109 : vector<64x64xf32>
    %cst_26 = arith.constant 0.707106769 : f32
    %112 = vector.broadcast %cst_26 : f32 to vector<64x64xf32>
    %113 = arith.mulf %109, %112 : vector<64x64xf32>
    %cst_27 = arith.constant 0.000000e+00 : f32
    %114 = vector.broadcast %cst_27 : f32 to vector<64x64xf32>
    %115 = arith.cmpf olt, %113, %114 : vector<64x64xf32>
    %cst_28 = arith.constant -1.000000e+00 : f32
    %cst_29 = arith.constant 1.000000e+00 : f32
    %116 = vector.broadcast %cst_28 : f32 to vector<64x64xf32>
    %117 = vector.broadcast %cst_29 : f32 to vector<64x64xf32>
    %118 = arith.select %115, %116, %117 : vector<64x64xi1>, vector<64x64xf32>
    %119 = math.absf %113 : vector<64x64xf32>
    %cst_30 = arith.constant 0.327591091 : f32
    %120 = vector.broadcast %cst_30 : f32 to vector<64x64xf32>
    %121 = arith.mulf %120, %119 : vector<64x64xf32>
    %cst_31 = arith.constant 1.000000e+00 : f32
    %122 = vector.broadcast %cst_31 : f32 to vector<64x64xf32>
    %123 = arith.addf %122, %121 : vector<64x64xf32>
    %cst_32 = arith.constant 1.000000e+00 : f32
    %124 = vector.broadcast %cst_32 : f32 to vector<64x64xf32>
    %125 = arith.divf %124, %123 : vector<64x64xf32>
    %cst_33 = arith.constant 1.06140542 : f32
    %126 = vector.broadcast %cst_33 : f32 to vector<64x64xf32>
    %127 = arith.mulf %126, %125 : vector<64x64xf32>
    %cst_34 = arith.constant -1.45315206 : f32
    %128 = vector.broadcast %cst_34 : f32 to vector<64x64xf32>
    %129 = arith.addf %127, %128 : vector<64x64xf32>
    %130 = arith.mulf %129, %125 : vector<64x64xf32>
    %cst_35 = arith.constant 1.42141378 : f32
    %131 = vector.broadcast %cst_35 : f32 to vector<64x64xf32>
    %132 = arith.addf %130, %131 : vector<64x64xf32>
    %133 = arith.mulf %132, %125 : vector<64x64xf32>
    %cst_36 = arith.constant -0.284496725 : f32
    %134 = vector.broadcast %cst_36 : f32 to vector<64x64xf32>
    %135 = arith.addf %133, %134 : vector<64x64xf32>
    %136 = arith.mulf %135, %125 : vector<64x64xf32>
    %cst_37 = arith.constant 0.254829586 : f32
    %137 = vector.broadcast %cst_37 : f32 to vector<64x64xf32>
    %138 = arith.addf %136, %137 : vector<64x64xf32>
    %139 = arith.mulf %138, %125 : vector<64x64xf32>
    %cst_38 = arith.constant 0.000000e+00 : f32
    %140 = vector.broadcast %cst_38 : f32 to vector<64x64xf32>
    %141 = arith.subf %140, %119 : vector<64x64xf32>
    %142 = arith.mulf %141, %119 : vector<64x64xf32>
    %143 = math.exp %142 : vector<64x64xf32>
    %144 = arith.mulf %139, %143 : vector<64x64xf32>
    %cst_39 = arith.constant 1.000000e+00 : f32
    %145 = vector.broadcast %cst_39 : f32 to vector<64x64xf32>
    %146 = arith.subf %145, %144 : vector<64x64xf32>
    %147 = arith.mulf %118, %146 : vector<64x64xf32>
    %cst_40 = arith.constant 1.000000e+00 : f32
    %148 = vector.broadcast %cst_40 : f32 to vector<64x64xf32>
    %149 = arith.addf %148, %147 : vector<64x64xf32>
    %150 = arith.mulf %111, %149 : vector<64x64xf32>
    %151 = arith.truncf %150 : vector<64x64xf32> to vector<64x64xbf16>
    %c0_41 = arith.constant 0 : index
    %c0_42 = arith.constant 0 : index
    %152 = vector.load %arg6[%c0_41, %c0_42] : memref<64x32xbf16, #tpu.memory_space<vmem>>, vector<64x32xbf16>
    %cst_43 = arith.constant dense<0.000000e+00> : vector<64x32xf32>
    %153 = tpu.matmul %151, %152, %cst_43 {dimension_numbers = #tpu.dot_dimension_numbers<[1], [0], [0], [1], [0, 0, 1, 1], [], []>} : vector<64x64xbf16>, vector<64x32xbf16>, vector<64x32xf32> -> vector<64x32xf32>
    %154 = vector.broadcast %6 : vector<1x32xf32> to vector<64x32xf32>
    %155 = arith.addf %153, %154 : vector<64x32xf32>
    %156 = arith.addf %104, %155 : vector<64x32xf32>
    %cst_44 = arith.constant dense<0.000000e+00> : vector<64xf32>
    %157 = vector.multi_reduction <add>, %156, %cst_44 [1] : vector<64x32xf32> to vector<64xf32>
    %158 = vector.shape_cast %157 : vector<64xf32> to vector<64x1xf32>
    %cst_45 = arith.constant 3.200000e+01 : f32
    %159 = vector.broadcast %cst_45 : f32 to vector<64x1xf32>
    %160 = arith.divf %158, %159 : vector<64x1xf32>
    %161 = vector.broadcast %160 : vector<64x1xf32> to vector<64x32xf32>
    %162 = arith.subf %156, %161 : vector<64x32xf32>
    %163 = arith.mulf %162, %162 : vector<64x32xf32>
    %cst_46 = arith.constant dense<0.000000e+00> : vector<64xf32>
    %164 = vector.multi_reduction <add>, %163, %cst_46 [1] : vector<64x32xf32> to vector<64xf32>
    %165 = vector.shape_cast %164 : vector<64xf32> to vector<64x1xf32>
    %cst_47 = arith.constant 3.200000e+01 : f32
    %166 = vector.broadcast %cst_47 : f32 to vector<64x1xf32>
    %167 = arith.divf %165, %166 : vector<64x1xf32>
    %cst_48 = arith.constant 9.99999974E-6 : f32
    %168 = vector.broadcast %cst_48 : f32 to vector<64x1xf32>
    %169 = arith.addf %167, %168 : vector<64x1xf32>
    %170 = math.rsqrt %169 : vector<64x1xf32>
    %171 = vector.broadcast %170 : vector<64x1xf32> to vector<64x32xf32>
    %172 = arith.mulf %162, %171 : vector<64x32xf32>
    %173 = vector.broadcast %7 : vector<1x32xf32> to vector<64x32xf32>
    %174 = arith.mulf %172, %173 : vector<64x32xf32>
    %175 = vector.broadcast %8 : vector<1x32xf32> to vector<64x32xf32>
    %176 = arith.addf %174, %175 : vector<64x32xf32>
    %177 = vector.shape_cast %176 : vector<64x32xf32> to vector<2x32x32xf32>
    %178 = arith.truncf %177 : vector<2x32x32xf32> to vector<2x32x32xbf16>
    %c0_49 = arith.constant 0 : index
    %c0_50 = arith.constant 0 : index
    %c0_51 = arith.constant 0 : index
    %179 = vector.load %arg8[%c0_49, %c0_50, %c0_51] : memref<2x32x32xbf16, #tpu.memory_space<vmem>>, vector<2x32x32xbf16>
    tpu.vector_store %arg8[%c0_49, %c0_50, %c0_51], %178 {strides = array<i32>} : memref<2x32x32xbf16, #tpu.memory_space<vmem>>, vector<2x32x32xbf16>,
    return
  }
  func.func @transform_0(%arg0: i32) -> (i32, i32, i32) {
    %c0_i32 = arith.constant 0 : i32
    %c0_i32_0 = arith.constant 0 : i32
    %c0_i32_1 = arith.constant 0 : i32
    return %c0_i32, %arg0, %c0_i32_0 : i32, i32, i32
  }
  func.func @transform_1(%arg0: i32) -> (i32, i32, i32) {
    %c0_i32 = arith.constant 0 : i32
    %c0_i32_0 = arith.constant 0 : i32
    %c0_i32_1 = arith.constant 0 : i32
    return %c0_i32, %arg0, %c0_i32_0 : i32, i32, i32
  }
  func.func @transform_2(%arg0: i32) -> (i32, i32) {
    %c0_i32 = arith.constant 0 : i32
    %c0_i32_0 = arith.constant 0 : i32
    %c0_i32_1 = arith.constant 0 : i32
    return %c0_i32, %c0_i32_0 : i32, i32
  }
  func.func @transform_3(%arg0: i32) -> (i32, i32) {
    %c0_i32 = arith.constant 0 : i32
    %c0_i32_0 = arith.constant 0 : i32
    %c0_i32_1 = arith.constant 0 : i32
    return %c0_i32, %c0_i32_0 : i32, i32
  }
  func.func @transform_4(%arg0: i32) -> (i32, i32) {
    %c0_i32 = arith.constant 0 : i32
    %c0_i32_0 = arith.constant 0 : i32
    %c0_i32_1 = arith.constant 0 : i32
    return %c0_i32, %c0_i32_0 : i32, i32
  }
  func.func @transform_5(%arg0: i32) -> (i32, i32) {
    %c0_i32 = arith.constant 0 : i32
    %c0_i32_0 = arith.constant 0 : i32
    %c0_i32_1 = arith.constant 0 : i32
    return %c0_i32, %c0_i32_0 : i32, i32
  }
  func.func @transform_6(%arg0: i32) -> (i32, i32) {
    %c0_i32 = arith.constant 0 : i32
    %c0_i32_0 = arith.constant 0 : i32
    %c0_i32_1 = arith.constant 0 : i32
    return %c0_i32, %c0_i32_0 : i32, i32
  }
  func.func @transform_7(%arg0: i32) -> (i32, i32, i32) {
    %c0_i32 = arith.constant 0 : i32
    %c0_i32_0 = arith.constant 0 : i32
    %c0_i32_1 = arith.constant 0 : i32
    return %c0_i32, %arg0, %c0_i32_0 : i32, i32, i32
  }
}

module attributes {stable_mosaic.version = 11 : i64} {
  func.func @_tail_kernel(%arg0: i32, %arg1: i32, %arg2: memref<1x32x32xbf16, #tpu.memory_space<vmem>>, %arg3: memref<1x16x32xf32, #tpu.memory_space<vmem>>, %arg4: memref<1x16x32xf32, #tpu.memory_space<vmem>>, %arg5: memref<1x32x32xf32, #tpu.memory_space<vmem>>, %arg6: memref<64x32xbf16, #tpu.memory_space<vmem>>, %arg7: memref<64x32xbf16, #tpu.memory_space<vmem>>, %arg8: memref<64x32xbf16, #tpu.memory_space<vmem>>, %arg9: memref<64x2xf32, #tpu.memory_space<vmem>>, %arg10: memref<1x32x32xf32, #tpu.memory_space<vmem>>, %arg11: memref<1x32x32xf32, #tpu.memory_space<vmem>>) attributes {dimension_semantics = [#tpu.dimension_semantics<parallel>, #tpu.dimension_semantics<parallel>], iteration_bounds = array<i64: 2, 1>, scalar_prefetch = 0 : i64, scratch_operands = 0 : i64, tpu.core_type = #tpu.core_type<tc>, window_params = [{transform_indices = @transform_0, window_bounds = array<i64: 1, 32, 32>}, {transform_indices = @transform_1, window_bounds = array<i64: 1, 16, 32>}, {transform_indices = @transform_2, window_bounds = array<i64: 1, 16, 32>}, {transform_indices = @transform_3, window_bounds = array<i64: 1, 32, 32>}, {pipeline_mode = #tpu.pipeline_mode<synchronous>, transform_indices = @transform_4, window_bounds = array<i64: 64, 32>}, {pipeline_mode = #tpu.pipeline_mode<synchronous>, transform_indices = @transform_5, window_bounds = array<i64: 64, 32>}, {pipeline_mode = #tpu.pipeline_mode<synchronous>, transform_indices = @transform_6, window_bounds = array<i64: 64, 32>}, {pipeline_mode = #tpu.pipeline_mode<synchronous>, transform_indices = @transform_7, window_bounds = array<i64: 64, 2>}, {transform_indices = @transform_8, window_bounds = array<i64: 1, 32, 32>}, {transform_indices = @transform_9, window_bounds = array<i64: 1, 32, 32>}]} {
    %c0 = arith.constant 0 : index
    %c0_0 = arith.constant 0 : index
    %0 = vector.load %arg9[%c0, %c0_0] : memref<64x2xf32, #tpu.memory_space<vmem>>, vector<64x2xf32>
    %1 = vector.extract_strided_slice %0 {offsets = [0, 0], sizes = [64, 1], strides = [1, 1]} : vector<64x2xf32> to vector<64x1xf32>
    %2 = vector.extract_strided_slice %0 {offsets = [0, 1], sizes = [64, 1], strides = [1, 1]} : vector<64x2xf32> to vector<64x1xf32>
    %c0_1 = arith.constant 0 : index
    %c0_2 = arith.constant 0 : index
    %3 = vector.load %arg7[%c0_1, %c0_2] : memref<64x32xbf16, #tpu.memory_space<vmem>>, vector<64x32xbf16>
    %4 = vector.extract_strided_slice %3 {offsets = [0, 0], sizes = [64, 16], strides = [1, 1]} : vector<64x32xbf16> to vector<64x16xbf16>
    %5 = vector.extract_strided_slice %3 {offsets = [0, 16], sizes = [64, 16], strides = [1, 1]} : vector<64x32xbf16> to vector<64x16xbf16>
    %c0_3 = arith.constant 0 : index
    %c0_4 = arith.constant 0 : index
    %6 = vector.load %arg6[%c0_3, %c0_4] : memref<64x32xbf16, #tpu.memory_space<vmem>>, vector<64x32xbf16>
    %c0_5 = arith.constant 0 : index
    %c0_6 = arith.constant 0 : index
    %c0_7 = arith.constant 0 : index
    %7 = vector.load %arg2[%c0_5, %c0_6, %c0_7] : memref<1x32x32xbf16, #tpu.memory_space<vmem>>, vector<1x32x32xbf16>
    %8 = vector.shape_cast %7 : vector<1x32x32xbf16> to vector<32x32xbf16>
    %cst = arith.constant dense<0.000000e+00> : vector<64x32xf32>
    %9 = tpu.matmul %6, %8, %cst {dimension_numbers = #tpu.dot_dimension_numbers<[1], [0], [0], [1], [0, 0, 1, 1], [], []>} : vector<64x32xbf16>, vector<32x32xbf16>, vector<64x32xf32> -> vector<64x32xf32>
    %c0_8 = arith.constant 0 : index
    %c0_9 = arith.constant 0 : index
    %c0_10 = arith.constant 0 : index
    %10 = vector.load %arg3[%c0_8, %c0_9, %c0_10] : memref<1x16x32xf32, #tpu.memory_space<vmem>>, vector<1x16x32xf32>
    %11 = vector.shape_cast %10 : vector<1x16x32xf32> to vector<16x32xf32>
    %12 = arith.truncf %11 : vector<16x32xf32> to vector<16x32xbf16>
    %cst_11 = arith.constant dense<0.000000e+00> : vector<64x32xf32>
    %13 = tpu.matmul %4, %12, %cst_11 {dimension_numbers = #tpu.dot_dimension_numbers<[1], [0], [0], [1], [0, 0, 1, 1], [], []>} : vector<64x16xbf16>, vector<16x32xbf16>, vector<64x32xf32> -> vector<64x32xf32>
    %14 = arith.addf %9, %13 : vector<64x32xf32>
    %c0_12 = arith.constant 0 : index
    %c0_13 = arith.constant 0 : index
    %c0_14 = arith.constant 0 : index
    %15 = vector.load %arg4[%c0_12, %c0_13, %c0_14] : memref<1x16x32xf32, #tpu.memory_space<vmem>>, vector<1x16x32xf32>
    %16 = vector.shape_cast %15 : vector<1x16x32xf32> to vector<16x32xf32>
    %17 = arith.truncf %16 : vector<16x32xf32> to vector<16x32xbf16>
    %cst_15 = arith.constant dense<0.000000e+00> : vector<64x32xf32>
    %18 = tpu.matmul %5, %17, %cst_15 {dimension_numbers = #tpu.dot_dimension_numbers<[1], [0], [0], [1], [0, 0, 1, 1], [], []>} : vector<64x16xbf16>, vector<16x32xbf16>, vector<64x32xf32> -> vector<64x32xf32>
    %19 = arith.addf %14, %18 : vector<64x32xf32>
    %20 = vector.broadcast %1 : vector<64x1xf32> to vector<64x32xf32>
    %21 = arith.addf %19, %20 : vector<64x32xf32>
    %22 = vector.extract_strided_slice %21 {offsets = [0, 0], sizes = [32, 32], strides = [1, 1]} : vector<64x32xf32> to vector<32x32xf32>
    %23 = arith.negf %22 : vector<32x32xf32>
    %24 = math.exp %23 : vector<32x32xf32>
    %cst_16 = arith.constant 1.000000e+00 : f32
    %25 = vector.broadcast %cst_16 : f32 to vector<32x32xf32>
    %26 = arith.addf %25, %24 : vector<32x32xf32>
    %27 = arith.divf %25, %26 : vector<32x32xf32>
    %28 = vector.extract_strided_slice %21 {offsets = [32, 0], sizes = [32, 32], strides = [1, 1]} : vector<64x32xf32> to vector<32x32xf32>
    %29 = math.tanh %28 : vector<32x32xf32>
    %30 = arith.mulf %27, %29 : vector<32x32xf32>
    %c0_17 = arith.constant 0 : index
    %c0_18 = arith.constant 0 : index
    %31 = vector.load %arg8[%c0_17, %c0_18] : memref<64x32xbf16, #tpu.memory_space<vmem>>, vector<64x32xbf16>
    %32 = arith.truncf %30 : vector<32x32xf32> to vector<32x32xbf16>
    %cst_19 = arith.constant dense<0.000000e+00> : vector<64x32xf32>
    %33 = tpu.matmul %31, %32, %cst_19 {dimension_numbers = #tpu.dot_dimension_numbers<[1], [0], [0], [1], [0, 0, 1, 1], [], []>} : vector<64x32xbf16>, vector<32x32xbf16>, vector<64x32xf32> -> vector<64x32xf32>
    %34 = vector.broadcast %2 : vector<64x1xf32> to vector<64x32xf32>
    %35 = arith.addf %33, %34 : vector<64x32xf32>
    %c0_20 = arith.constant 0 : index
    %c0_21 = arith.constant 0 : index
    %c0_22 = arith.constant 0 : index
    %36 = vector.load %arg5[%c0_20, %c0_21, %c0_22] : memref<1x32x32xf32, #tpu.memory_space<vmem>>, vector<1x32x32xf32>
    %37 = vector.shape_cast %36 : vector<1x32x32xf32> to vector<32x32xf32>
    %38 = vector.extract_strided_slice %35 {offsets = [0, 0], sizes = [32, 32], strides = [1, 1]} : vector<64x32xf32> to vector<32x32xf32>
    %39 = arith.addf %37, %38 : vector<32x32xf32>
    %cst_23 = arith.constant 0.707106769 : f32
    %40 = vector.broadcast %cst_23 : f32 to vector<32x32xf32>
    %41 = arith.mulf %39, %40 : vector<32x32xf32>
    %c0_24 = arith.constant 0 : index
    %c0_25 = arith.constant 0 : index
    %c0_26 = arith.constant 0 : index
    %42 = vector.load %arg10[%c0_24, %c0_25, %c0_26] : memref<1x32x32xf32, #tpu.memory_space<vmem>>, vector<1x32x32xf32>
    %43 = vector.shape_cast %42 : vector<1x32x32xf32> to vector<32x32xf32>
    %44 = vector.shape_cast %41 : vector<32x32xf32> to vector<1x32x32xf32>
    tpu.vector_store %arg10[%c0_24, %c0_25, %c0_26], %44 {strides = array<i32>} : memref<1x32x32xf32, #tpu.memory_space<vmem>>, vector<1x32x32xf32>,
    %45 = vector.extract_strided_slice %35 {offsets = [32, 0], sizes = [32, 32], strides = [1, 1]} : vector<64x32xf32> to vector<32x32xf32>
    %c0_27 = arith.constant 0 : index
    %c0_28 = arith.constant 0 : index
    %c0_29 = arith.constant 0 : index
    %46 = vector.load %arg11[%c0_27, %c0_28, %c0_29] : memref<1x32x32xf32, #tpu.memory_space<vmem>>, vector<1x32x32xf32>
    %47 = vector.shape_cast %46 : vector<1x32x32xf32> to vector<32x32xf32>
    %48 = vector.shape_cast %45 : vector<32x32xf32> to vector<1x32x32xf32>
    tpu.vector_store %arg11[%c0_27, %c0_28, %c0_29], %48 {strides = array<i32>} : memref<1x32x32xf32, #tpu.memory_space<vmem>>, vector<1x32x32xf32>,
    return
  }
  func.func @transform_0(%arg0: i32, %arg1: i32) -> (i32, i32, i32) {
    %c0_i32 = arith.constant 0 : i32
    %c0_i32_0 = arith.constant 0 : i32
    return %arg0, %c0_i32, %arg1 : i32, i32, i32
  }
  func.func @transform_1(%arg0: i32, %arg1: i32) -> (i32, i32, i32) {
    %c0_i32 = arith.constant 0 : i32
    %c0_i32_0 = arith.constant 0 : i32
    return %arg0, %c0_i32, %arg1 : i32, i32, i32
  }
  func.func @transform_2(%arg0: i32, %arg1: i32) -> (i32, i32, i32) {
    %c0_i32 = arith.constant 0 : i32
    %c0_i32_0 = arith.constant 0 : i32
    return %arg0, %c0_i32, %arg1 : i32, i32, i32
  }
  func.func @transform_3(%arg0: i32, %arg1: i32) -> (i32, i32, i32) {
    %c0_i32 = arith.constant 0 : i32
    %c0_i32_0 = arith.constant 0 : i32
    return %arg0, %c0_i32, %arg1 : i32, i32, i32
  }
  func.func @transform_4(%arg0: i32, %arg1: i32) -> (i32, i32) {
    %c0_i32 = arith.constant 0 : i32
    %c0_i32_0 = arith.constant 0 : i32
    %c0_i32_1 = arith.constant 0 : i32
    return %c0_i32, %c0_i32_0 : i32, i32
  }
  func.func @transform_5(%arg0: i32, %arg1: i32) -> (i32, i32) {
    %c0_i32 = arith.constant 0 : i32
    %c0_i32_0 = arith.constant 0 : i32
    %c0_i32_1 = arith.constant 0 : i32
    return %c0_i32, %c0_i32_0 : i32, i32
  }
  func.func @transform_6(%arg0: i32, %arg1: i32) -> (i32, i32) {
    %c0_i32 = arith.constant 0 : i32
    %c0_i32_0 = arith.constant 0 : i32
    %c0_i32_1 = arith.constant 0 : i32
    return %c0_i32, %c0_i32_0 : i32, i32
  }
  func.func @transform_7(%arg0: i32, %arg1: i32) -> (i32, i32) {
    %c0_i32 = arith.constant 0 : i32
    %c0_i32_0 = arith.constant 0 : i32
    %c0_i32_1 = arith.constant 0 : i32
    return %c0_i32, %c0_i32_0 : i32, i32
  }
  func.func @transform_8(%arg0: i32, %arg1: i32) -> (i32, i32, i32) {
    %c0_i32 = arith.constant 0 : i32
    %c0_i32_0 = arith.constant 0 : i32
    return %arg0, %c0_i32, %arg1 : i32, i32, i32
  }
  func.func @transform_9(%arg0: i32, %arg1: i32) -> (i32, i32, i32) {
    %c0_i32 = arith.constant 0 : i32
    %c0_i32_0 = arith.constant 0 : i32
    return %arg0, %c0_i32, %arg1 : i32, i32, i32
  }
}

</mosaic_0001>

<llo_original>
// kernel: residual_block_forward.3
$region0: #{residual_block_forward.3}
  #allocation0 [shape = 'u32[]', space=smem, size = 0x4, offset = 0x4, fixed_abs, tag = 'smem constant byte address 0x4 - core index']
  #allocation1 [shape = 'u32[72,128]{1,0:T(1,128)}', space=vmem, size = 0x9000, scoped, tag = 'internal scratch']
  %s0 = inlined_call_operand.vmem [shape: bf16[2,32,32], index: 0, kind: input, shape index: {}]
  %s1 = inlined_call_operand.vmem [shape: f32[2,16,32], index: 1, kind: input, shape index: {}]
  %s2 = inlined_call_operand.vmem [shape: f32[2,16,32], index: 2, kind: input, shape index: {}]
  %s3 = inlined_call_operand.vmem [shape: f32[2,32,32], index: 3, kind: input, shape index: {}]
  %s4 = inlined_call_operand.vmem [shape: bf16[64,32], index: 4, kind: input, shape index: {}]
  %s5 = inlined_call_operand.vmem [shape: bf16[64,32], index: 5, kind: input, shape index: {}]
  %s6 = inlined_call_operand.vmem [shape: bf16[64,32], index: 6, kind: input, shape index: {}]
  %s7 = inlined_call_operand.vmem [shape: f32[64,2], index: 7, kind: input, shape index: {}]
  %s8 = inlined_call_operand.hbm [shape: f32[2,32,32], index: 8, kind: output, shape index: {0}]
  %s9 = inlined_call_operand.hbm [shape: f32[2,32,32], index: 9, kind: output, shape index: {1}]
  %10 = xla_tuple %s8, %s9
  %s11 = sld [smem:[#allocation0]]
  $region73: #{residual_block_forward.3} parent=0
    _
  %s13 = ssub.s32 1, %s11
  %s14 = scalar_select 0, %s13, %s11
  $region1: #{residual_block_forward.3} parent=0
    #allocation2 [shape = 'u8[32768]{0}', space=vmem, size = 0x8000, scoped, tag = 'output window, operand 0']
    #allocation3 [shape = 's32[2]{0}', space=sflag, size = 0x8, scoped, tag = 'scoped memory for residual_block_forward.3']
    #allocation4 [shape = 'u8[32768]{0}', space=vmem, size = 0x8000, scoped, tag = 'output window, operand 1']
    #allocation5 [shape = 's32[2]{0}', space=sflag, size = 0x8, scoped, tag = 'scoped memory for residual_block_forward.3']
    %15 = vsyncpa [#allocation3], 0
    %s16 = scalar_lea.sflag [#allocation3], 1
    %17 = vsyncpa %s16, 0
    %18 = vsyncpa [#allocation5], 0
    %s19 = scalar_lea.sflag [#allocation5], 1
    %20 = vsyncpa %s19, 0
    loop: start=0, step=1, limit=4
    $region2: #{residual_block_forward.3} parent=1 // loop_pre_header
      _
    $region3: #{residual_block_forward.3} parent=1 // loop_header
      %s22 = sphi 0, %s26
      %p23 = scmp.ge.s32.totalorder %s22, 4
      %s29 = sphi 0, %s41
      %s30 = sphi 0, %s37
      %s31 = sphi 0, %s29
      %s32 = sphi 0, %s30
      %s33 = sphi 0, %s31
      %s34 = sphi 0, %s32
      %s46 = sphi 0, %s48
      %s49 = sphi 0, %s46
      %s50 = sphi 0, %s49
      %s66 = sphi 0, %s50
      %s74 = sphi 0, %s76
      %s77 = sphi 0, %s74
      %s78 = sphi 0, %s77
      %s94 = sphi 0, %s78
      %s102 = sphi 0, %s104
      %s105 = sphi 0, %s102
      %s106 = sphi 0, %s105
      %s122 = sphi 0, %s106
      %s130 = sphi 0, %s132
      %s133 = sphi 0, %s130
      %s134 = sphi 0, %s133
      %s150 = sphi 0, %s134
      %s154 = sphi 0, %s154
      %s156 = sphi 0, %s154
      %s157 = sphi 0, %s156
      %s171 = sphi 0, %s157
      %s175 = sphi 0, %s175
      %s177 = sphi 0, %s175
      %s178 = sphi 0, %s177
      %s192 = sphi 0, %s178
      %s196 = sphi 0, %s196
      %s198 = sphi 0, %s196
      %s199 = sphi 0, %s198
      %s213 = sphi 0, %s199
      %s217 = sphi 0, %s217
      %s219 = sphi 0, %s217
      %s220 = sphi 0, %s219
      %s234 = sphi 0, %s220
      %s242 = sphi 0, %s244
      %s245 = sphi 0, %s242
      %s246 = sphi 0, %s245
      %s262 = sphi 0, %s246
      %s270 = sphi 0, %s272
      %s273 = sphi 0, %s270
      %s274 = sphi 0, %s273
      %s290 = sphi 0, %s274
    $region4: #{residual_block_forward.3} parent=1 // loop_header_branch
      %25 = sbr.rel (%p23) target = $region8
    $region5: #{residual_block_forward.3} parent=1 // loop_body
      %s27 = ssub.s32 %s22, 1
      %s28 = ssub.s32 %s22, 2
      %s35 = sadd.s32 1, %s30
      %p36 = scmp.ge.s32.totalorder %s35, 1
      %s37 = scalar_select %p36, 0, %s35
      %s38 = sadd.s32 1, %s29
      %s39 = scalar_select %p36, %s38, %s29
      %p40 = scmp.ge.s32.totalorder %s39, 2
      %s41 = scalar_select %p40, 0, %s39
      %s42 = ssub.s32 %s29, %s41
      %s43 = ssub.s32 %s30, %s37
      %s44 = sor.u32 %s42, %s43
      %p45 = scmp.eq.s32.totalorder %s44, 0
      %s47 = sadd.s32 %s46, 1
      %s48 = scalar_select %p45, %s46, %s47
      %p51 = pneg %p45
      %p52 = scmp.eq.s32.totalorder %s22, 1
      %p53 = por %p51, %p52
      %p54 = scmp.ne.s32.totalorder %s46, %s49
      %p55 = scmp.eq.s32.totalorder %s22, 0
      %p56 = por %p54, %p55
      %p57 = scmp.ne.s32.totalorder %s46, %s49
      %p58 = scmp.eq.s32.totalorder %s27, 1
      %p59 = por %p57, %p58
      %p60 = scmp.ne.s32.totalorder %s49, %s50
      %p61 = scmp.eq.s32.totalorder %s27, 0
      %p62 = por %p60, %p61
      %p63 = scmp.ne.s32.totalorder %s49, %s50
      %p64 = scmp.eq.s32.totalorder %s28, 1
      %p65 = por %p63, %p64
      %p67 = scmp.ne.s32.totalorder %s50, %s66
      %p68 = scmp.eq.s32.totalorder %s28, 0
      %p69 = por %p67, %p68
      %s70 = ssub.s32 %s29, %s41
      %s71 = ssub.s32 %s30, %s37
      %s72 = sor.u32 %s70, %s71
      %p73 = scmp.eq.s32.totalorder %s72, 0
      %s75 = sadd.s32 %s74, 1
      %s76 = scalar_select %p73, %s74, %s75
      %p79 = pneg %p73
      %p80 = scmp.eq.s32.totalorder %s22, 1
      %p81 = por %p79, %p80
      %p82 = scmp.ne.s32.totalorder %s74, %s77
      %p83 = scmp.eq.s32.totalorder %s22, 0
      %p84 = por %p82, %p83
      %p85 = scmp.ne.s32.totalorder %s74, %s77
      %p86 = scmp.eq.s32.totalorder %s27, 1
      %p87 = por %p85, %p86
      %p88 = scmp.ne.s32.totalorder %s77, %s78
      %p89 = scmp.eq.s32.totalorder %s27, 0
      %p90 = por %p88, %p89
      %p91 = scmp.ne.s32.totalorder %s77, %s78
      %p92 = scmp.eq.s32.totalorder %s28, 1
      %p93 = por %p91, %p92
      %p95 = scmp.ne.s32.totalorder %s78, %s94
      %p96 = scmp.eq.s32.totalorder %s28, 0
      %p97 = por %p95, %p96
      %s98 = ssub.s32 %s29, %s41
      %s99 = ssub.s32 %s30, %s37
      %s100 = sor.u32 %s98, %s99
      %p101 = scmp.eq.s32.totalorder %s100, 0
      %s103 = sadd.s32 %s102, 1
      %s104 = scalar_select %p101, %s102, %s103
      %p107 = pneg %p101
      %p108 = scmp.eq.s32.totalorder %s22, 1
      %p109 = por %p107, %p108
      %p110 = scmp.ne.s32.totalorder %s102, %s105
      %p111 = scmp.eq.s32.totalorder %s22, 0
      %p112 = por %p110, %p111
      %p113 = scmp.ne.s32.totalorder %s102, %s105
      %p114 = scmp.eq.s32.totalorder %s27, 1
      %p115 = por %p113, %p114
      %p116 = scmp.ne.s32.totalorder %s105, %s106
      %p117 = scmp.eq.s32.totalorder %s27, 0
      %p118 = por %p116, %p117
      %p119 = scmp.ne.s32.totalorder %s105, %s106
      %p120 = scmp.eq.s32.totalorder %s28, 1
      %p121 = por %p119, %p120
      %p123 = scmp.ne.s32.totalorder %s106, %s122
      %p124 = scmp.eq.s32.totalorder %s28, 0
      %p125 = por %p123, %p124
      %s126 = ssub.s32 %s29, %s41
      %s127 = ssub.s32 %s30, %s37
      %s128 = sor.u32 %s126, %s127
      %p129 = scmp.eq.s32.totalorder %s128, 0
      %s131 = sadd.s32 %s130, 1
      %s132 = scalar_select %p129, %s130, %s131
      %p135 = pneg %p129
      %p136 = scmp.eq.s32.totalorder %s22, 1
      %p137 = por %p135, %p136
      %p138 = scmp.ne.s32.totalorder %s130, %s133
      %p139 = scmp.eq.s32.totalorder %s22, 0
      %p140 = por %p138, %p139
      %p141 = scmp.ne.s32.totalorder %s130, %s133
      %p142 = scmp.eq.s32.totalorder %s27, 1
      %p143 = por %p141, %p142
      %p144 = scmp.ne.s32.totalorder %s133, %s134
      %p145 = scmp.eq.s32.totalorder %s27, 0
      %p146 = por %p144, %p145
      %p147 = scmp.ne.s32.totalorder %s133, %s134
      %p148 = scmp.eq.s32.totalorder %s28, 1
      %p149 = por %p147, %p148
      %p151 = scmp.ne.s32.totalorder %s134, %s150
      %p152 = scmp.eq.s32.totalorder %s28, 0
      %p153 = por %p151, %p152
      %s155 = sadd.s32 %s154, 1
      %p158 = scmp.eq.s32.totalorder %s22, 1
      %p159 = scmp.ne.s32.totalorder %s154, %s156
      %p160 = scmp.eq.s32.totalorder %s22, 0
      %p161 = por %p159, %p160
      %p162 = scmp.ne.s32.totalorder %s154, %s156
      %p163 = scmp.eq.s32.totalorder %s27, 1
      %p164 = por %p162, %p163
      %p165 = scmp.ne.s32.totalorder %s156, %s157
      %p166 = scmp.eq.s32.totalorder %s27, 0
      %p167 = por %p165, %p166
      %p168 = scmp.ne.s32.totalorder %s156, %s157
      %p169 = scmp.eq.s32.totalorder %s28, 1
      %p170 = por %p168, %p169
      %p172 = scmp.ne.s32.totalorder %s157, %s171
      %p173 = scmp.eq.s32.totalorder %s28, 0
      %p174 = por %p172, %p173
      %s176 = sadd.s32 %s175, 1
      %p179 = scmp.eq.s32.totalorder %s22, 1
      %p180 = scmp.ne.s32.totalorder %s175, %s177
      %p181 = scmp.eq.s32.totalorder %s22, 0
      %p182 = por %p180, %p181
      %p183 = scmp.ne.s32.totalorder %s175, %s177
      %p184 = scmp.eq.s32.totalorder %s27, 1
      %p185 = por %p183, %p184
      %p186 = scmp.ne.s32.totalorder %s177, %s178
      %p187 = scmp.eq.s32.totalorder %s27, 0
      %p188 = por %p186, %p187
      %p189 = scmp.ne.s32.totalorder %s177, %s178
      %p190 = scmp.eq.s32.totalorder %s28, 1
      %p191 = por %p189, %p190
      %p193 = scmp.ne.s32.totalorder %s178, %s192
      %p194 = scmp.eq.s32.totalorder %s28, 0
      %p195 = por %p193, %p194
      %s197 = sadd.s32 %s196, 1
      %p200 = scmp.eq.s32.totalorder %s22, 1
      %p201 = scmp.ne.s32.totalorder %s196, %s198
      %p202 = scmp.eq.s32.totalorder %s22, 0
      %p203 = por %p201, %p202
      %p204 = scmp.ne.s32.totalorder %s196, %s198
      %p205 = scmp.eq.s32.totalorder %s27, 1
      %p206 = por %p204, %p205
      %p207 = scmp.ne.s32.totalorder %s198, %s199
      %p208 = scmp.eq.s32.totalorder %s27, 0
      %p209 = por %p207, %p208
      %p210 = scmp.ne.s32.totalorder %s198, %s199
      %p211 = scmp.eq.s32.totalorder %s28, 1
      %p212 = por %p210, %p211
      %p214 = scmp.ne.s32.totalorder %s199, %s213
      %p215 = scmp.eq.s32.totalorder %s28, 0
      %p216 = por %p214, %p215
      %s218 = sadd.s32 %s217, 1
      %p221 = scmp.eq.s32.totalorder %s22, 1
      %p222 = scmp.ne.s32.totalorder %s217, %s219
      %p223 = scmp.eq.s32.totalorder %s22, 0
      %p224 = por %p222, %p223
      %p225 = scmp.ne.s32.totalorder %s217, %s219
      %p226 = scmp.eq.s32.totalorder %s27, 1
      %p227 = por %p225, %p226
      %p228 = scmp.ne.s32.totalorder %s219, %s220
      %p229 = scmp.eq.s32.totalorder %s27, 0
      %p230 = por %p228, %p229
      %p231 = scmp.ne.s32.totalorder %s219, %s220
      %p232 = scmp.eq.s32.totalorder %s28, 1
      %p233 = por %p231, %p232
      %p235 = scmp.ne.s32.totalorder %s220, %s234
      %p236 = scmp.eq.s32.totalorder %s28, 0
      %p237 = por %p235, %p236
      %s238 = ssub.s32 %s29, %s41
      %s239 = ssub.s32 %s30, %s37
      %s240 = sor.u32 %s238, %s239
      %p241 = scmp.eq.s32.totalorder %s240, 0
      %s243 = sadd.s32 %s242, 1
      %s244 = scalar_select %p241, %s242, %s243
      %p247 = pneg %p241
      %p248 = scmp.eq.s32.totalorder %s22, 1
      %p249 = por %p247, %p248
      %p250 = scmp.ne.s32.totalorder %s242, %s245
      %p251 = scmp.eq.s32.totalorder %s22, 0
      %p252 = por %p250, %p251
      %p253 = scmp.ne.s32.totalorder %s242, %s245
      %p254 = scmp.eq.s32.totalorder %s27, 1
      %p255 = por %p253, %p254
      %p256 = scmp.ne.s32.totalorder %s245, %s246
      %p257 = scmp.eq.s32.totalorder %s27, 0
      %p258 = por %p256, %p257
      %p259 = scmp.ne.s32.totalorder %s245, %s246
      %p260 = scmp.eq.s32.totalorder %s28, 1
      %p261 = por %p259, %p260
      %p263 = scmp.ne.s32.totalorder %s246, %s262
      %p264 = scmp.eq.s32.totalorder %s28, 0
      %p265 = por %p263, %p264
      %s266 = ssub.s32 %s29, %s41
      %s267 = ssub.s32 %s30, %s37
      %s268 = sor.u32 %s266, %s267
      %p269 = scmp.eq.s32.totalorder %s268, 0
      %s271 = sadd.s32 %s270, 1
      %s272 = scalar_select %p269, %s270, %s271
      %p275 = pneg %p269
      %p276 = scmp.eq.s32.totalorder %s22, 1
      %p277 = por %p275, %p276
      %p278 = scmp.ne.s32.totalorder %s270, %s273
      %p279 = scmp.eq.s32.totalorder %s22, 0
      %p280 = por %p278, %p279
      %p281 = scmp.ne.s32.totalorder %s270, %s273
      %p282 = scmp.eq.s32.totalorder %s27, 1
      %p283 = por %p281, %p282
      %p284 = scmp.ne.s32.totalorder %s273, %s274
      %p285 = scmp.eq.s32.totalorder %s27, 0
      %p286 = por %p284, %p285
      %p287 = scmp.ne.s32.totalorder %s273, %s274
      %p288 = scmp.eq.s32.totalorder %s28, 1
      %p289 = por %p287, %p288
      %p291 = scmp.ne.s32.totalorder %s274, %s290
      %p292 = scmp.eq.s32.totalorder %s28, 0
      %p293 = por %p291, %p292
      %p294 = scmp.le.s32.totalorder 1, %s22
      %p295 = scmp.lt.s32.totalorder %s22, 3
      %p296 = pnand %p294, %p295
      %p297 = pneg %p296
      // Predicated region
      $region9: #{residual_block_forward.3} parent=5 // pred_check
        _
      $region10: #{residual_block_forward.3} parent=5 // pred_check_branch
        %299 = sbr.rel (%p296) target = $region12
      $region11: #{residual_block_forward.3} parent=5 // pred_region
        %s300 = ssub.s32 %s22, 1
        // Predicated region
        $region13: #{residual_block_forward.3} parent=11 // pred_check
          %p301 = pneg %p167
        $region14: #{residual_block_forward.3} parent=11 // pred_check_branch
          %303 = sbr.rel (%p301) target = $region16
        $region15: #{residual_block_forward.3} parent=11 // pred_region
          _
        $region16: #{residual_block_forward.3} parent=11 // pred_fallthru
          _
        // Predicated region
        $region17: #{residual_block_forward.3} parent=11 // pred_check
          %p304 = pneg %p188
        $region18: #{residual_block_forward.3} parent=11 // pred_check_branch
          %306 = sbr.rel (%p304) target = $region20
        $region19: #{residual_block_forward.3} parent=11 // pred_region
          _
        $region20: #{residual_block_forward.3} parent=11 // pred_fallthru
          _
        // Predicated region
        $region21: #{residual_block_forward.3} parent=11 // pred_check
          %p307 = pneg %p209
        $region22: #{residual_block_forward.3} parent=11 // pred_check_branch
          %309 = sbr.rel (%p307) target = $region24
        $region23: #{residual_block_forward.3} parent=11 // pred_region
          _
        $region24: #{residual_block_forward.3} parent=11 // pred_fallthru
          _
        // Predicated region
        $region25: #{residual_block_forward.3} parent=11 // pred_check
          %p310 = pneg %p230
        $region26: #{residual_block_forward.3} parent=11 // pred_check_branch
          %312 = sbr.rel (%p310) target = $region28
        $region27: #{residual_block_forward.3} parent=11 // pred_region
          _
        $region28: #{residual_block_forward.3} parent=11 // pred_fallthru
          _
      $region12: #{residual_block_forward.3} parent=5 // pred_fallthru
        _
      %p313 = scmp.lt.s32.totalorder %s22, 2
      // Predicated region
      $region29: #{residual_block_forward.3} parent=5 // pred_check
        %p314 = pneg %p313
      $region30: #{residual_block_forward.3} parent=5 // pred_check_branch
        %316 = sbr.rel (%p314) target = $region32
      $region31: #{residual_block_forward.3} parent=5 // pred_region
        // Predicated region
        $region33: #{residual_block_forward.3} parent=31 // pred_check
          %p317 = pneg %p56
        $region34: #{residual_block_forward.3} parent=31 // pred_check_branch
          %319 = sbr.rel (%p317) target = $region36
        $region35: #{residual_block_forward.3} parent=31 // pred_region
          %p320 = scmp.lt.s32.totalorder %s29, 1
          %s321 = scalar_select %p320, %s29, 1
          %p322 = scmp.lt.s32.totalorder %s30, 0
          %s323 = scalar_select %p322, %s30, 0
          %s324 = smul.addr %s321, 4
          %s325 = sadd.s32 %s323, %s324
          %s326 = smul.addr %s325, 4
          %s327 = scalar_lea.vmem %s0, %s326
        $region36: #{residual_block_forward.3} parent=31 // pred_fallthru
          _
        // Predicated region
        $region37: #{residual_block_forward.3} parent=31 // pred_check
          %p328 = pneg %p84
        $region38: #{residual_block_forward.3} parent=31 // pred_check_branch
          %330 = sbr.rel (%p328) target = $region40
        $region39: #{residual_block_forward.3} parent=31 // pred_region
          %p331 = scmp.lt.s32.totalorder %s29, 1
          %s332 = scalar_select %p331, %s29, 1
          %p333 = scmp.lt.s32.totalorder %s30, 0
          %s334 = scalar_select %p333, %s30, 0
          %s335 = smul.addr %s332, 2
          %s336 = sadd.s32 %s334, %s335
          %s337 = smul.addr %s336, 8
          %s338 = scalar_lea.vmem %s1, %s337
        $region40: #{residual_block_forward.3} parent=31 // pred_fallthru
          _
        // Predicated region
        $region41: #{residual_block_forward.3} parent=31 // pred_check
          %p339 = pneg %p112
        $region42: #{residual_block_forward.3} parent=31 // pred_check_branch
          %341 = sbr.rel (%p339) target = $region44
        $region43: #{residual_block_forward.3} parent=31 // pred_region
          %p342 = scmp.lt.s32.totalorder %s29, 1
          %s343 = scalar_select %p342, %s29, 1
          %p344 = scmp.lt.s32.totalorder %s30, 0
          %s345 = scalar_select %p344, %s30, 0
          %s346 = smul.addr %s343, 2
          %s347 = sadd.s32 %s345, %s346
          %s348 = smul.addr %s347, 8
          %s349 = scalar_lea.vmem %s2, %s348
        $region44: #{residual_block_forward.3} parent=31 // pred_fallthru
          _
        // Predicated region
        $region45: #{residual_block_forward.3} parent=31 // pred_check
          %p350 = pneg %p140
        $region46: #{residual_block_forward.3} parent=31 // pred_check_branch
          %352 = sbr.rel (%p350) target = $region48
        $region47: #{residual_block_forward.3} parent=31 // pred_region
          %p353 = scmp.lt.s32.totalorder %s29, 1
          %s354 = scalar_select %p353, %s29, 1
          %p355 = scmp.lt.s32.totalorder %s30, 0
          %s356 = scalar_select %p355, %s30, 0
          %s357 = smul.addr %s354, 4
          %s358 = sadd.s32 %s356, %s357
          %s359 = smul.addr %s358, 8
          %s360 = scalar_lea.vmem %s3, %s359
        $region48: #{residual_block_forward.3} parent=31 // pred_fallthru
          _
      $region32: #{residual_block_forward.3} parent=5 // pred_fallthru
        _
      %p361 = scmp.le.s32.totalorder 1, %s22
      %p362 = scmp.lt.s32.totalorder %s22, 3
      %p363 = pnand %p361, %p362
      %p364 = pneg %p363
      // Predicated region
      $region49: #{residual_block_forward.3} parent=5 // pred_check
        _
      $region50: #{residual_block_forward.3} parent=5 // pred_check_branch
        %366 = sbr.rel (%p363) target = $region52
      $region51: #{residual_block_forward.3} parent=5 // pred_region
        %s367 = ssub.s32 %s22, 1
        %p368 = scmp.lt.s32.totalorder %s31, 1
        %s369 = scalar_select %p368, %s31, 1
        %p370 = scmp.lt.s32.totalorder %s32, 0
        %s371 = scalar_select %p370, %s32, 0
        %s372 = smul.addr %s369, 4
        %s373 = sadd.s32 %s371, %s372
        %s374 = smul.addr %s373, 4
        %s375 = scalar_lea.vmem %s0, %s374
        %p376 = pneg %p62
        %p377 = pneg %p59
        %p378 = scmp.lt.s32.totalorder %s31, 1
        %s379 = scalar_select %p378, %s31, 1
        %p380 = scmp.lt.s32.totalorder %s32, 0
        %s381 = scalar_select %p380, %s32, 0
        %s382 = smul.addr %s379, 2
        %s383 = sadd.s32 %s381, %s382
        %s384 = smul.addr %s383, 8
        %s385 = scalar_lea.vmem %s1, %s384
        %p386 = pneg %p90
        %p387 = pneg %p87
        %p388 = scmp.lt.s32.totalorder %s31, 1
        %s389 = scalar_select %p388, %s31, 1
        %p390 = scmp.lt.s32.totalorder %s32, 0
        %s391 = scalar_select %p390, %s32, 0
        %s392 = smul.addr %s389, 2
        %s393 = sadd.s32 %s391, %s392
        %s394 = smul.addr %s393, 8
        %s395 = scalar_lea.vmem %s2, %s394
        %p396 = pneg %p118
        %p397 = pneg %p115
        %p398 = scmp.lt.s32.totalorder %s31, 1
        %s399 = scalar_select %p398, %s31, 1
        %p400 = scmp.lt.s32.totalorder %s32, 0
        %s401 = scalar_select %p400, %s32, 0
        %s402 = smul.addr %s399, 4
        %s403 = sadd.s32 %s401, %s402
        %s404 = smul.addr %s403, 8
        %s405 = scalar_lea.vmem %s3, %s404
        %p406 = pneg %p146
        %p407 = pneg %p143
        %p408 = pneg %p167
        %p409 = pneg %p164
        %p410 = pneg %p188
        %p411 = pneg %p185
        %p412 = pneg %p209
        %p413 = pneg %p206
        %p414 = pneg %p230
        %p415 = pneg %p227
        %p416 = pneg %p258
        %p417 = pneg %p255
        %s418 = sand.u32 %s245, 1
        %s419 = scalar_lea.sflag [#allocation3], %s418
        %s420 = sand.u32 %s245, 1
        %s421 = smul.addr %s420, 32
        %s422 = scalar_lea.vmem [#allocation2], %s421
        %p423 = pneg %p286
        %p424 = pneg %p283
        %s425 = sand.u32 %s273, 1
        %s426 = scalar_lea.sflag [#allocation5], %s425
        %s427 = sand.u32 %s273, 1
        %s428 = smul.addr %s427, 32
        %s429 = scalar_lea.vmem [#allocation4], %s428
        %p430 = scmp.lt.s32.totalorder %s31, 1
        %s431 = scalar_select %p430, %s31, 1
        %p432 = scmp.lt.s32.totalorder %s32, 0
        %s433 = scalar_select %p432, %s32, 0
        %s434 = smul.addr %s431, 4
        %s435 = sadd.s32 %s433, %s434
        %s436 = smul.addr %s435, 4
        %s437 = scalar_lea.vmem %s0, %s436
        %p438 = scmp.lt.s32.totalorder %s31, 1
        %s439 = scalar_select %p438, %s31, 1
        %p440 = scmp.lt.s32.totalorder %s32, 0
        %s441 = scalar_select %p440, %s32, 0
        %s442 = smul.addr %s439, 2
        %s443 = sadd.s32 %s441, %s442
        %s444 = smul.addr %s443, 8
        %s445 = scalar_lea.vmem %s1, %s444
        %p446 = scmp.lt.s32.totalorder %s31, 1
        %s447 = scalar_select %p446, %s31, 1
        %p448 = scmp.lt.s32.totalorder %s32, 0
        %s449 = scalar_select %p448, %s32, 0
        %s450 = smul.addr %s447, 2
        %s451 = sadd.s32 %s449, %s450
        %s452 = smul.addr %s451, 8
        %s453 = scalar_lea.vmem %s2, %s452
        %p454 = scmp.lt.s32.totalorder %s31, 1
        %s455 = scalar_select %p454, %s31, 1
        %p456 = scmp.lt.s32.totalorder %s32, 0
        %s457 = scalar_select %p456, %s32, 0
        %s458 = smul.addr %s455, 4
        %s459 = sadd.s32 %s457, %s458
        %s460 = smul.addr %s459, 8
        %s461 = scalar_lea.vmem %s3, %s460
        %v463 = vld [vmem:[%s7] sm:$0xff]
        %v464 = vld [vmem:[%s7 + $0x8] sm:$0xff]
        %v465 = vld [vmem:[%s7 + $0x10] sm:$0xff]
        %v466 = vld [vmem:[%s7 + $0x18] sm:$0xff]
        %v467 = vld [vmem:[%s7 + $0x20] sm:$0xff]
        %v468 = vld [vmem:[%s7 + $0x28] sm:$0xff]
        %v469 = vld [vmem:[%s7 + $0x30] sm:$0xff]
        %v470 = vld [vmem:[%s7 + $0x38] sm:$0xff]
        %v471 = vld [vmem:[%s5] sm:$0xf]
        %v472 = vld [vmem:[%s5 + $0x4] sm:$0xf]
        %v473 = vld [vmem:[%s5 + $0x8] sm:$0xf]
        %v474 = vld [vmem:[%s5 + $0xc] sm:$0xf]
        %v475 = vld [vmem:[%s5 + $0x10] sm:$0xf]
        %v476 = vld [vmem:[%s5 + $0x14] sm:$0xf]
        %v477 = vld [vmem:[%s5 + $0x18] sm:$0xf]
        %v478 = vld [vmem:[%s5 + $0x1c] sm:$0xf]
        %v479 = vld [vmem:[%s4] sm:$0xf]
        %v480 = vld [vmem:[%s4 + $0x4] sm:$0xf]
        %v481 = vld [vmem:[%s4 + $0x8] sm:$0xf]
        %v482 = vld [vmem:[%s4 + $0xc] sm:$0xf]
        %v483 = vld [vmem:[%s4 + $0x10] sm:$0xf]
        %v484 = vld [vmem:[%s4 + $0x14] sm:$0xf]
        %v485 = vld [vmem:[%s4 + $0x18] sm:$0xf]
        %v486 = vld [vmem:[%s4 + $0x1c] sm:$0xf]
        %v487 = vld [vmem:[%s437] sm:$0xf]
        %v488 = vld [vmem:[%s437 + $0x4] sm:$0xf]
        %v489 = vld [vmem:[%s437 + $0x8] sm:$0xf]
        %v490 = vld [vmem:[%s437 + $0xc] sm:$0xf]
        %v491 = vld [vmem:[%s445] sm:$0xff]
        %v492 = vld [vmem:[%s445 + $0x8] sm:$0xff]
        %v493 = vpack.c.bf16 %v492, %v491
        %v502 = vunpack.c.l.b16 %v471
        %v503 = vunpack.c.l.b16 %v472
        %v504 = vunpack.c.l.b16 %v473
        %v505 = vunpack.c.l.b16 %v474
        %v506 = vunpack.c.l.b16 %v475
        %v507 = vunpack.c.l.b16 %v476
        %v508 = vunpack.c.l.b16 %v477
        %v509 = vunpack.c.l.b16 %v478
        %v510 = vpack.c.b16 %v503, %v502
        %v511 = vpack.c.b16 %v505, %v504
        %v512 = vpack.c.b16 %v507, %v506
        %v513 = vpack.c.b16 %v509, %v508
        %vm514 = vcmask 130048
        %v516 = vsel %vm514, %v510, 0
        %v519 = vsel %vm514, %v511, 0
        %v522 = vsel %vm514, %v512, 0
        %v525 = vsel %vm514, %v513, 0
        %527 = vmatpush.bf16.msra.mxu0 0
        %528 = vmatpush.bf16.msra.mxu0 0
        %529 = vmatpush.bf16.msra.mxu0 0
        %530 = vmatpush.bf16.msra.mxu0 0
        %531 = vmatpush.bf16.msra.mxu0 0
        %532 = vmatpush.bf16.msra.mxu0 0
        %533 = vmatpush.bf16.msra.mxu0 0
        %534 = vmatpush.bf16.msra.mxu0 %v493
        %535 = vmatmul.bf16.gmra.mxu0 %v516
        %v536 = vpop.f32.mrf.mxu0
        %v537 = vadd.f32 0.0, %v536
        %v538 = vpop.f32.mrf.mxu0
        %v539 = vadd.f32 0.0, %v538
        %540 = vmatmul.bf16.gmra.mxu0 %v519
        %v541 = vpop.f32.mrf.mxu0
        %v542 = vadd.f32 0.0, %v541
        %v543 = vpop.f32.mrf.mxu0
        %v544 = vadd.f32 0.0, %v543
        %545 = vmatmul.bf16.gmra.mxu0 %v522
        %v546 = vpop.f32.mrf.mxu0
        %v547 = vadd.f32 0.0, %v546
        %v548 = vpop.f32.mrf.mxu0
        %v549 = vadd.f32 0.0, %v548
        %550 = vmatmul.bf16.gmra.mxu0 %v525
        %v551 = vpop.f32.mrf.mxu0
        %v552 = vadd.f32 0.0, %v551
        %v553 = vpop.f32.mrf.mxu0
        %v554 = vadd.f32 0.0, %v553
        %555 = vdwg.mxu0
        %v564 = vunpack.c.l.b16 %v479
        %v565 = vunpack.c.l.b16 %v480
        %v566 = vunpack.c.l.b16 %v481
        %v567 = vunpack.c.l.b16 %v482
        %v568 = vunpack.c.l.b16 %v483
        %v569 = vunpack.c.l.b16 %v484
        %v570 = vunpack.c.l.b16 %v485
        %v571 = vunpack.c.l.b16 %v486
        %v572 = vpack.c.b16 %v565, %v564
        %v573 = vpack.c.b16 %v567, %v566
        %v574 = vpack.c.b16 %v569, %v568
        %v575 = vpack.c.b16 %v571, %v570
        %v580 = vunpack.c.l.b16 %v487
        %v581 = vunpack.c.l.b16 %v488
        %v582 = vunpack.c.l.b16 %v489
        %v583 = vunpack.c.l.b16 %v490
        %v584 = vpack.c.b16 %v581, %v580
        %v585 = vpack.c.b16 %v583, %v582
        %vm588 = vcmask 261120
        %v590 = vsel %vm588, %v572, 0
        %v593 = vsel %vm588, %v573, 0
        %v596 = vsel %vm588, %v574, 0
        %v599 = vsel %vm588, %v575, 0
        %601 = vmatpush.bf16.msra.mxu0 0
        %602 = vmatpush.bf16.msra.mxu0 0
        %603 = vmatpush.bf16.msra.mxu0 0
        %604 = vmatpush.bf16.msra.mxu0 0
        %605 = vmatpush.bf16.msra.mxu0 0
        %606 = vmatpush.bf16.msra.mxu0 0
        %607 = vmatpush.bf16.msra.mxu0 %v585
        %608 = vmatpush.bf16.msra.mxu0 %v584
        %609 = vmatmul.bf16.gmra.mxu0 %v590
        %v610 = vpop.f32.mrf.mxu0
        %v611 = vadd.f32 %v537, %v610
        %v612 = vpop.f32.mrf.mxu0
        %v613 = vadd.f32 %v539, %v612
        %614 = vmatmul.bf16.gmra.mxu0 %v593
        %v615 = vpop.f32.mrf.mxu0
        %v616 = vadd.f32 %v542, %v615
        %v617 = vpop.f32.mrf.mxu0
        %v618 = vadd.f32 %v544, %v617
        %619 = vmatmul.bf16.gmra.mxu0 %v596
        %v620 = vpop.f32.mrf.mxu0
        %v621 = vadd.f32 %v547, %v620
        %v622 = vpop.f32.mrf.mxu0
        %v623 = vadd.f32 %v549, %v622
        %624 = vmatmul.bf16.gmra.mxu0 %v599
        %v625 = vpop.f32.mrf.mxu0
        %v626 = vadd.f32 %v552, %v625
        %v627 = vpop.f32.mrf.mxu0
        %v628 = vadd.f32 %v554, %v627
        %629 = vdwg.mxu0
        %v630 = vld [vmem:[%s453] sm:$0xff]
        %v631 = vld [vmem:[%s453 + $0x8] sm:$0xff]
        %v632 = vpack.c.bf16 %v631, %v630
        %633 = vrot.lane.b32.xlu0 %v510, 112
        %v634 = vpop.permute.xlu0 %633
        %635 = vrot.lane.b32.xlu0 %v511, 112
        %v636 = vpop.permute.xlu0 %635
        %637 = vrot.lane.b32.xlu0 %v512, 112
        %v638 = vpop.permute.xlu0 %637
        %639 = vrot.lane.b32.xlu0 %v513, 112
        %v640 = vpop.permute.xlu0 %639
        %v642 = vsel %vm514, %v634, 0
        %v645 = vsel %vm514, %v636, 0
        %v648 = vsel %vm514, %v638, 0
        %v651 = vsel %vm514, %v640, 0
        %653 = vmatpush.bf16.msra.mxu0 0
        %654 = vmatpush.bf16.msra.mxu0 0
        %655 = vmatpush.bf16.msra.mxu0 0
        %656 = vmatpush.bf16.msra.mxu0 0
        %657 = vmatpush.bf16.msra.mxu0 0
        %658 = vmatpush.bf16.msra.mxu0 0
        %659 = vmatpush.bf16.msra.mxu0 0
        %660 = vmatpush.bf16.msra.mxu0 %v632
        %661 = vmatmul.bf16.gmra.mxu0 %v642
        %v662 = vpop.f32.mrf.mxu0
        %v663 = vadd.f32 0.0, %v662
        %v664 = vpop.f32.mrf.mxu0
        %v665 = vadd.f32 0.0, %v664
        %666 = vmatmul.bf16.gmra.mxu0 %v645
        %v667 = vpop.f32.mrf.mxu0
        %v668 = vadd.f32 0.0, %v667
        %v669 = vpop.f32.mrf.mxu0
        %v670 = vadd.f32 0.0, %v669
        %671 = vmatmul.bf16.gmra.mxu0 %v648
        %v672 = vpop.f32.mrf.mxu0
        %v673 = vadd.f32 0.0, %v672
        %v674 = vpop.f32.mrf.mxu0
        %v675 = vadd.f32 0.0, %v674
        %676 = vmatmul.bf16.gmra.mxu0 %v651
        %v677 = vpop.f32.mrf.mxu0
        %v678 = vadd.f32 0.0, %v677
        %v679 = vpop.f32.mrf.mxu0
        %v680 = vadd.f32 0.0, %v679
        %681 = vdwg.mxu0
        %v682 = vadd.f32 %v611, %v663
        %v683 = vadd.f32 %v613, %v665
        %v684 = vadd.f32 %v616, %v668
        %v685 = vadd.f32 %v618, %v670
        %v686 = vadd.f32 %v621, %v673
        %v687 = vadd.f32 %v623, %v675
        %v688 = vadd.f32 %v626, %v678
        %v689 = vadd.f32 %v628, %v680
        %691 = vset.pattern.permute.xlu0 0
        %692 = vperm.xlu0 %691, %v463
        %v693 = vpop.permute.xlu0 %692
        %696 = vset.pattern.permute.xlu0 0
        %697 = vperm.xlu0 %696, %v464
        %v698 = vpop.permute.xlu0 %697
        %701 = vset.pattern.permute.xlu0 0
        %702 = vperm.xlu0 %701, %v465
        %v703 = vpop.permute.xlu0 %702
        %706 = vset.pattern.permute.xlu0 0
        %707 = vperm.xlu0 %706, %v466
        %v708 = vpop.permute.xlu0 %707
        %711 = vset.pattern.permute.xlu0 0
        %712 = vperm.xlu0 %711, %v467
        %v713 = vpop.permute.xlu0 %712
        %716 = vset.pattern.permute.xlu0 0
        %717 = vperm.xlu0 %716, %v468
        %v718 = vpop.permute.xlu0 %717
        %721 = vset.pattern.permute.xlu0 0
        %722 = vperm.xlu0 %721, %v469
        %v723 = vpop.permute.xlu0 %722
        %726 = vset.pattern.permute.xlu0 0
        %727 = vperm.xlu0 %726, %v470
        %v728 = vpop.permute.xlu0 %727
        %v730 = vadd.f32 %v682, %v693
        %v731 = vadd.f32 %v683, %v698
        %v732 = vadd.f32 %v684, %v703
        %v733 = vadd.f32 %v685, %v708
        %v734 = vadd.f32 %v686, %v713
        %v735 = vadd.f32 %v687, %v718
        %v736 = vadd.f32 %v688, %v723
        %v737 = vadd.f32 %v689, %v728
        %v738 = vxor.u32 %v730, 2147483648
        %v739 = vxor.u32 %v731, 2147483648
        %v740 = vxor.u32 %v732, 2147483648
        %v741 = vxor.u32 %v733, 2147483648
        %v742 = vmul.f32 %v738, 1.442695
        %v743 = vpow.pop %v742
        %v744 = vmul.f32 %v739, 1.442695
        %v745 = vpow.pop %v744
        %v746 = vmul.f32 %v740, 1.442695
        %v747 = vpow.pop %v746
        %v748 = vmul.f32 %v741, 1.442695
        %v749 = vpow.pop %v748
        %v750 = vadd.f32 %v743, 1.0
        %v751 = vadd.f32 %v745, 1.0
        %v752 = vadd.f32 %v747, 1.0
        %v753 = vadd.f32 %v749, 1.0
        %v754 = vrcp.pop %v750
        %v755 = vmul.f32 %v750, %v754
        %v756 = vsub.f32 1.0, %v755
        %v757 = vmul.f32 %v754, %v756
        %v758 = vadd.f32 %v754, %v757
        %vm759 = vweird.f32 %v750
        %vm760 = vweird.f32 %v754
        %vm761 = vmor %vm759, %vm760
        %v762 = vsel %vm761, %v754, %v758
        %v763 = vand.u32 2147483647, %v750
        %vm764 = vcmp.eq.f32.partialorder %v763, 8.507059e+37
        %v765 = vand.u32 %v750, 2147483648
        %v766 = vor.u32 1.1754944e-38, %v765
        %v767 = vsel %vm764, %v766, %v762
        %v768 = vmul.f32 1.0, %v767
        %v769 = vrcp.pop %v751
        %v770 = vmul.f32 %v751, %v769
        %v771 = vsub.f32 1.0, %v770
        %v772 = vmul.f32 %v769, %v771
        %v773 = vadd.f32 %v769, %v772
        %vm774 = vweird.f32 %v751
        %vm775 = vweird.f32 %v769
        %vm776 = vmor %vm774, %vm775
        %v777 = vsel %vm776, %v769, %v773
        %v778 = vand.u32 2147483647, %v751
        %vm779 = vcmp.eq.f32.partialorder %v778, 8.507059e+37
        %v780 = vand.u32 %v751, 2147483648
        %v781 = vor.u32 1.1754944e-38, %v780
        %v782 = vsel %vm779, %v781, %v777
        %v783 = vmul.f32 1.0, %v782
        %v784 = vrcp.pop %v752
        %v785 = vmul.f32 %v752, %v784
        %v786 = vsub.f32 1.0, %v785
        %v787 = vmul.f32 %v784, %v786
        %v788 = vadd.f32 %v784, %v787
        %vm789 = vweird.f32 %v752
        %vm790 = vweird.f32 %v784
        %vm791 = vmor %vm789, %vm790
        %v792 = vsel %vm791, %v784, %v788
        %v793 = vand.u32 2147483647, %v752
        %vm794 = vcmp.eq.f32.partialorder %v793, 8.507059e+37
        %v795 = vand.u32 %v752, 2147483648
        %v796 = vor.u32 1.1754944e-38, %v795
        %v797 = vsel %vm794, %v796, %v792
        %v798 = vmul.f32 1.0, %v797
        %v799 = vrcp.pop %v753
        %v800 = vmul.f32 %v753, %v799
        %v801 = vsub.f32 1.0, %v800
        %v802 = vmul.f32 %v799, %v801
        %v803 = vadd.f32 %v799, %v802
        %vm804 = vweird.f32 %v753
        %vm805 = vweird.f32 %v799
        %vm806 = vmor %vm804, %vm805
        %v807 = vsel %vm806, %v799, %v803
        %v808 = vand.u32 2147483647, %v753
        %vm809 = vcmp.eq.f32.partialorder %v808, 8.507059e+37
        %v810 = vand.u32 %v753, 2147483648
        %v811 = vor.u32 1.1754944e-38, %v810
        %v812 = vsel %vm809, %v811, %v807
        %v813 = vmul.f32 1.0, %v812
        %v814 = vtanh.pop %v734
        %v815 = vtanh.pop %v735
        %v816 = vtanh.pop %v736
        %v817 = vtanh.pop %v737
        %v818 = vmul.f32 %v768, %v814
        %v819 = vmul.f32 %v783, %v815
        %v820 = vmul.f32 %v798, %v816
        %v821 = vmul.f32 %v813, %v817
        %v822 = vld [vmem:[%s6] sm:$0xf]
        %v823 = vld [vmem:[%s6 + $0x4] sm:$0xf]
        %v824 = vld [vmem:[%s6 + $0x8] sm:$0xf]
        %v825 = vld [vmem:[%s6 + $0xc] sm:$0xf]
        %v826 = vld [vmem:[%s6 + $0x10] sm:$0xf]
        %v827 = vld [vmem:[%s6 + $0x14] sm:$0xf]
        %v828 = vld [vmem:[%s6 + $0x18] sm:$0xf]
        %v829 = vld [vmem:[%s6 + $0x1c] sm:$0xf]
        %v830 = vpack.c.bf16 %v819, %v818
        %v831 = vpack.c.bf16 %v821, %v820
        %832 = vset.pattern.permute.xlu0 1
        %833 = vperm.xlu0 %832, %v463
        %v834 = vpop.permute.xlu0 %833
        %836 = vset.pattern.permute.xlu0 1
        %837 = vperm.xlu0 %836, %v464
        %v838 = vpop.permute.xlu0 %837
        %840 = vset.pattern.permute.xlu0 1
        %841 = vperm.xlu0 %840, %v465
        %v842 = vpop.permute.xlu0 %841
        %844 = vset.pattern.permute.xlu0 1
        %845 = vperm.xlu0 %844, %v466
        %v846 = vpop.permute.xlu0 %845
        %848 = vset.pattern.permute.xlu0 1
        %849 = vperm.xlu0 %848, %v467
        %v850 = vpop.permute.xlu0 %849
        %852 = vset.pattern.permute.xlu0 1
        %853 = vperm.xlu0 %852, %v468
        %v854 = vpop.permute.xlu0 %853
        %856 = vset.pattern.permute.xlu0 1
        %857 = vperm.xlu0 %856, %v469
        %v858 = vpop.permute.xlu0 %857
        %860 = vset.pattern.permute.xlu0 1
        %861 = vperm.xlu0 %860, %v470
        %v862 = vpop.permute.xlu0 %861
        %v872 = vunpack.c.l.b16 %v822
        %v873 = vunpack.c.l.b16 %v823
        %v874 = vunpack.c.l.b16 %v824
        %v875 = vunpack.c.l.b16 %v825
        %v876 = vunpack.c.l.b16 %v826
        %v877 = vunpack.c.l.b16 %v827
        %v878 = vunpack.c.l.b16 %v828
        %v879 = vunpack.c.l.b16 %v829
        %v880 = vpack.c.b16 %v873, %v872
        %v881 = vpack.c.b16 %v875, %v874
        %v882 = vpack.c.b16 %v877, %v876
        %v883 = vpack.c.b16 %v879, %v878
        %v885 = vsel %vm588, %v880, 0
        %v888 = vsel %vm588, %v881, 0
        %v891 = vsel %vm588, %v882, 0
        %v894 = vsel %vm588, %v883, 0
        %896 = vmatpush.bf16.msra.mxu0 0
        %897 = vmatpush.bf16.msra.mxu0 0
        %898 = vmatpush.bf16.msra.mxu0 0
        %899 = vmatpush.bf16.msra.mxu0 0
        %900 = vmatpush.bf16.msra.mxu0 0
        %901 = vmatpush.bf16.msra.mxu0 0
        %902 = vmatpush.bf16.msra.mxu0 %v831
        %903 = vmatpush.bf16.msra.mxu0 %v830
        %904 = vmatmul.bf16.gmra.mxu0 %v885
        %v905 = vpop.f32.mrf.mxu0
        %v906 = vadd.f32 %v834, %v905
        %v907 = vpop.f32.mrf.mxu0
        %v908 = vadd.f32 %v838, %v907
        %909 = vmatmul.bf16.gmra.mxu0 %v888
        %v910 = vpop.f32.mrf.mxu0
        %v911 = vadd.f32 %v842, %v910
        %v912 = vpop.f32.mrf.mxu0
        %v913 = vadd.f32 %v846, %v912
        %914 = vmatmul.bf16.gmra.mxu0 %v891
        %v915 = vpop.f32.mrf.mxu0
        %v916 = vadd.f32 %v850, %v915
        %v917 = vpop.f32.mrf.mxu0
        %v918 = vadd.f32 %v854, %v917
        %919 = vmatmul.bf16.gmra.mxu0 %v894
        %v920 = vpop.f32.mrf.mxu0
        %v921 = vadd.f32 %v858, %v920
        %v922 = vpop.f32.mrf.mxu0
        %v923 = vadd.f32 %v862, %v922
        %924 = vdwg.mxu0
        %v925 = vld [vmem:[%s461] sm:$0xff]
        %v926 = vld [vmem:[%s461 + $0x8] sm:$0xff]
        %v927 = vld [vmem:[%s461 + $0x10] sm:$0xff]
        %v928 = vld [vmem:[%s461 + $0x18] sm:$0xff]
        %v929 = vadd.f32 %v925, %v906
        %v930 = vadd.f32 %v926, %v908
        %v931 = vadd.f32 %v927, %v911
        %v932 = vadd.f32 %v928, %v913
        %v933 = vmul.f32 %v929, 0.70710677
        %v934 = vmul.f32 %v930, 0.70710677
        %v935 = vmul.f32 %v931, 0.70710677
        %v936 = vmul.f32 %v932, 0.70710677
        %937 = vst.msk [vmem:[%s422] sm:$0xff] %vm588, %v933
        %938 = vst.msk [vmem:[%s422 + $0x8] sm:$0xff] %vm588, %v934
        %939 = vst.msk [vmem:[%s422 + $0x10] sm:$0xff] %vm588, %v935
        %940 = vst.msk [vmem:[%s422 + $0x18] sm:$0xff] %vm588, %v936
        %941 = vst.msk [vmem:[%s429] sm:$0xff] %vm588, %v916
        %942 = vst.msk [vmem:[%s429 + $0x8] sm:$0xff] %vm588, %v918
        %943 = vst.msk [vmem:[%s429 + $0x10] sm:$0xff] %vm588, %v921
        %944 = vst.msk [vmem:[%s429 + $0x18] sm:$0xff] %vm588, %v923
        %s945 = sand.u32 %s245, 1
        %s946 = scalar_lea.sflag [#allocation3], %s945
        %s947 = sand.u32 %s245, 1
        %s948 = smul.addr %s947, 32
        %s949 = scalar_lea.vmem [#allocation2], %s948
        %s950 = sand.u32 %s273, 1
        %s951 = scalar_lea.sflag [#allocation5], %s950
        %s952 = sand.u32 %s273, 1
        %s953 = smul.addr %s952, 32
        %s954 = scalar_lea.vmem [#allocation4], %s953
        // Predicated region
        $region53: #{residual_block_forward.3} parent=51 // pred_check
          %p955 = pneg %p255
        $region54: #{residual_block_forward.3} parent=51 // pred_check_branch
          %957 = sbr.rel (%p955) target = $region56
        $region55: #{residual_block_forward.3} parent=51 // pred_region
          %959 = vsyncadd %s946, 0
          %s960 = smul.addr %s31, 4
          %s961 = sadd.s32 %s32, %s960
          %s962 = smul.addr %s961, 8
          %s963 = scalar_lea.hbm %s8, %s962
          %s964 = sshll.u32 %s949, 4
          %s965 = int_to_ptr.vmem [resolvable:$true] %s964
          %s966 = sshll.u32 %s963, 4
          %s967 = int_to_ptr.hbm [resolvable:$true] %s966
          %972 = dma.vmem_to_hbm [thread:$0]  %s965, 512, %s967, %s946, 128, 128, 8
        $region56: #{residual_block_forward.3} parent=51 // pred_fallthru
          _
        // Predicated region
        $region57: #{residual_block_forward.3} parent=51 // pred_check
          %p973 = pneg %p283
        $region58: #{residual_block_forward.3} parent=51 // pred_check_branch
          %975 = sbr.rel (%p973) target = $region60
        $region59: #{residual_block_forward.3} parent=51 // pred_region
          %977 = vsyncadd %s951, 0
          %s978 = smul.addr %s31, 4
          %s979 = sadd.s32 %s32, %s978
          %s980 = smul.addr %s979, 8
          %s981 = scalar_lea.hbm %s9, %s980
          %s982 = sshll.u32 %s954, 4
          %s983 = int_to_ptr.vmem [resolvable:$true] %s982
          %s984 = sshll.u32 %s981, 4
          %s985 = int_to_ptr.hbm [resolvable:$true] %s984
          %990 = dma.vmem_to_hbm [thread:$0]  %s983, 512, %s985, %s951, 128, 128, 8
        $region60: #{residual_block_forward.3} parent=51 // pred_fallthru
          _
      $region52: #{residual_block_forward.3} parent=5 // pred_fallthru
        _
      %p991 = scmp.le.s32.totalorder 2, %s22
      // Predicated region
      $region61: #{residual_block_forward.3} parent=5 // pred_check
        %p992 = pneg %p991
      $region62: #{residual_block_forward.3} parent=5 // pred_check_branch
        %994 = sbr.rel (%p992) target = $region64
      $region63: #{residual_block_forward.3} parent=5 // pred_region
        %s995 = ssub.s32 %s22, 2
        // Predicated region
        $region65: #{residual_block_forward.3} parent=63 // pred_check
          %p996 = pneg %p261
        $region66: #{residual_block_forward.3} parent=63 // pred_check_branch
          %998 = sbr.rel (%p996) target = $region68
        $region67: #{residual_block_forward.3} parent=63 // pred_region
          %s999 = sand.u32 %s246, 1
          %s1000 = scalar_lea.sflag [#allocation3], %s999
          %s1001 = sand.u32 %s246, 1
          %s1002 = smul.addr %s1001, 32
          %s1003 = scalar_lea.vmem [#allocation2], %s1002
          %1005 = dma.done %s1000, 512
        $region68: #{residual_block_forward.3} parent=63 // pred_fallthru
          _
        // Predicated region
        $region69: #{residual_block_forward.3} parent=63 // pred_check
          %p1006 = pneg %p289
        $region70: #{residual_block_forward.3} parent=63 // pred_check_branch
          %1008 = sbr.rel (%p1006) target = $region72
        $region71: #{residual_block_forward.3} parent=63 // pred_region
          %s1009 = sand.u32 %s274, 1
          %s1010 = scalar_lea.sflag [#allocation5], %s1009
          %s1011 = sand.u32 %s274, 1
          %s1012 = smul.addr %s1011, 32
          %s1013 = scalar_lea.vmem [#allocation4], %s1012
          %1015 = dma.done %s1010, 512
        $region72: #{residual_block_forward.3} parent=63 // pred_fallthru
          _
      $region64: #{residual_block_forward.3} parent=5 // pred_fallthru
        _
    $region6: #{residual_block_forward.3} parent=1 // loop_footer
      %s26 = sadd.s32 1, %s22
    $region7: #{residual_block_forward.3} parent=1 // loop_footer_branch
      %21 = sbr.rel target = $region3
    $region8: #{residual_block_forward.3} parent=1 // loop_exit
      _
    %1016 = vsyncpa [#allocation3], 1
    %s1017 = scalar_lea.sflag [#allocation3], 1
    %1018 = vsyncpa %s1017, 1
    %1019 = vsyncpa [#allocation5], 1
    %s1020 = scalar_lea.sflag [#allocation5], 1
    %1021 = vsyncpa %s1020, 1

// kernel: residual_block_forward.2
$region0: #{residual_block_forward.2}
  #allocation0 [shape = 'u32[]', space=smem, size = 0x4, offset = 0x4, fixed_abs, tag = 'smem constant byte address 0x4 - core index']
  #allocation1 [shape = 'u32[72,128]{1,0:T(1,128)}', space=vmem, size = 0x9000, scoped, tag = 'internal scratch']
  %s0 = inlined_call_operand.vmem [shape: f32[2,32,32], index: 0, kind: input, shape index: {}]
  %s1 = inlined_call_operand.vmem [shape: f32[2,32,1], index: 1, kind: input, shape index: {}]
  %s2 = inlined_call_operand.vmem [shape: bf16[32,96], index: 2, kind: input, shape index: {}]
  %s3 = inlined_call_operand.vmem [shape: bf16[64,32], index: 3, kind: input, shape index: {}]
  %s4 = inlined_call_operand.vmem [shape: bf16[32,64], index: 4, kind: input, shape index: {}]
  %s5 = inlined_call_operand.vmem [shape: bf16[64,32], index: 5, kind: input, shape index: {}]
  %s6 = inlined_call_operand.vmem [shape: f32[8,96], index: 6, kind: input, shape index: {}]
  %s7 = inlined_call_operand.vmem [shape: bf16[2,32,32], index: 7, kind: output, shape index: {}]
  %s8 = sld [smem:[#allocation0]]
  $region38: #{residual_block_forward.2} parent=0
    _
  %s10 = ssub.s32 1, %s8
  %s11 = scalar_select 0, %s10, %s8
  // Predicated region
  $region2: #{residual_block_forward.2} parent=0 // pred_check
    _
  $region3: #{residual_block_forward.2} parent=0 // pred_check_branch
    %13 = sbr.rel (0) target = $region5
  $region4: #{residual_block_forward.2} parent=0 // pred_region
    _
  $region5: #{residual_block_forward.2} parent=0 // pred_fallthru
    _
  // Predicated region
  $region6: #{residual_block_forward.2} parent=0 // pred_check
    _
  $region7: #{residual_block_forward.2} parent=0 // pred_check_branch
    %15 = sbr.rel (0) target = $region9
  $region8: #{residual_block_forward.2} parent=0 // pred_region
    _
  $region9: #{residual_block_forward.2} parent=0 // pred_fallthru
    _
  // Predicated region
  $region10: #{residual_block_forward.2} parent=0 // pred_check
    _
  $region11: #{residual_block_forward.2} parent=0 // pred_check_branch
    %17 = sbr.rel (0) target = $region13
  $region12: #{residual_block_forward.2} parent=0 // pred_region
    _
  $region13: #{residual_block_forward.2} parent=0 // pred_fallthru
    _
  // Predicated region
  $region14: #{residual_block_forward.2} parent=0 // pred_check
    _
  $region15: #{residual_block_forward.2} parent=0 // pred_check_branch
    %19 = sbr.rel (0) target = $region17
  $region16: #{residual_block_forward.2} parent=0 // pred_region
    _
  $region17: #{residual_block_forward.2} parent=0 // pred_fallthru
    _
  // Predicated region
  $region18: #{residual_block_forward.2} parent=0 // pred_check
    _
  $region19: #{residual_block_forward.2} parent=0 // pred_check_branch
    %21 = sbr.rel (0) target = $region21
  $region20: #{residual_block_forward.2} parent=0 // pred_region
    _
  $region21: #{residual_block_forward.2} parent=0 // pred_fallthru
    _
  // Predicated region
  $region22: #{residual_block_forward.2} parent=0 // pred_check
    _
  $region23: #{residual_block_forward.2} parent=0 // pred_check_branch
    %23 = sbr.rel (0) target = $region25
  $region24: #{residual_block_forward.2} parent=0 // pred_region
    _
  $region25: #{residual_block_forward.2} parent=0 // pred_fallthru
    _
  // Predicated region
  $region26: #{residual_block_forward.2} parent=0 // pred_check
    _
  $region27: #{residual_block_forward.2} parent=0 // pred_check_branch
    %25 = sbr.rel (0) target = $region29
  $region28: #{residual_block_forward.2} parent=0 // pred_region
    _
  $region29: #{residual_block_forward.2} parent=0 // pred_fallthru
    _
  %v27 = vld [vmem:[%s6] sm:$0xff]
  %v28 = vld [vmem:[%s3] sm:$0xf]
  %v29 = vld [vmem:[%s3 + $0x4] sm:$0xf]
  %v30 = vld [vmem:[%s3 + $0x8] sm:$0xf]
  %v31 = vld [vmem:[%s3 + $0xc] sm:$0xf]
  %v32 = vld [vmem:[%s3 + $0x10] sm:$0xf]
  %v33 = vld [vmem:[%s3 + $0x14] sm:$0xf]
  %v34 = vld [vmem:[%s3 + $0x18] sm:$0xf]
  %v35 = vld [vmem:[%s3 + $0x1c] sm:$0xf]
  %v36 = vld [vmem:[%s0] sm:$0xff]
  %v37 = vld [vmem:[%s0 + $0x8] sm:$0xff]
  %v38 = vld [vmem:[%s0 + $0x10] sm:$0xff]
  %v39 = vld [vmem:[%s0 + $0x18] sm:$0xff]
  %v40 = vld [vmem:[%s0 + $0x20] sm:$0xff]
  %v41 = vld [vmem:[%s0 + $0x28] sm:$0xff]
  %v42 = vld [vmem:[%s0 + $0x30] sm:$0xff]
  %v43 = vld [vmem:[%s0 + $0x38] sm:$0xff]
  %v44 = vld [vmem:[%s1] sm:$0xff]
  %v45 = vld [vmem:[%s1 + $0x8] sm:$0xff]
  %v46 = vld [vmem:[%s1 + $0x10] sm:$0xff]
  %v47 = vld [vmem:[%s1 + $0x18] sm:$0xff]
  %v48 = vld [vmem:[%s1 + $0x20] sm:$0xff]
  %v49 = vld [vmem:[%s1 + $0x28] sm:$0xff]
  %v50 = vld [vmem:[%s1 + $0x30] sm:$0xff]
  %v51 = vld [vmem:[%s1 + $0x38] sm:$0xff]
  %53 = vset.pattern.permute.xlu0 0
  %54 = vperm.xlu0 %53, %v44
  %v55 = vpop.permute.xlu0 %54
  %58 = vset.pattern.permute.xlu0 0
  %59 = vperm.xlu0 %58, %v45
  %v60 = vpop.permute.xlu0 %59
  %63 = vset.pattern.permute.xlu0 0
  %64 = vperm.xlu0 %63, %v46
  %v65 = vpop.permute.xlu0 %64
  %68 = vset.pattern.permute.xlu0 0
  %69 = vperm.xlu0 %68, %v47
  %v70 = vpop.permute.xlu0 %69
  %73 = vset.pattern.permute.xlu0 0
  %74 = vperm.xlu0 %73, %v48
  %v75 = vpop.permute.xlu0 %74
  %78 = vset.pattern.permute.xlu0 0
  %79 = vperm.xlu0 %78, %v49
  %v80 = vpop.permute.xlu0 %79
  %83 = vset.pattern.permute.xlu0 0
  %84 = vperm.xlu0 %83, %v50
  %v85 = vpop.permute.xlu0 %84
  %88 = vset.pattern.permute.xlu0 0
  %89 = vperm.xlu0 %88, %v51
  %v90 = vpop.permute.xlu0 %89
  %v92 = vadd.f32 %v36, %v55
  %v93 = vadd.f32 %v37, %v60
  %v94 = vadd.f32 %v38, %v65
  %v95 = vadd.f32 %v39, %v70
  %v96 = vadd.f32 %v40, %v75
  %v97 = vadd.f32 %v41, %v80
  %v98 = vadd.f32 %v42, %v85
  %v99 = vadd.f32 %v43, %v90
  %v100 = vpack.c.bf16 %v93, %v92
  %v101 = vpack.c.bf16 %v95, %v94
  %v102 = vpack.c.bf16 %v97, %v96
  %v103 = vpack.c.bf16 %v99, %v98
  %v104 = vld [vmem:[%s2] sm:$0xf]
  %v105 = vld [vmem:[%s2 + $0x4] sm:$0xf]
  %v106 = vld [vmem:[%s2 + $0x8] sm:$0xf]
  %v107 = vld [vmem:[%s2 + $0xc] sm:$0xf]
  %v108 = vperm.slane %v27, 0
  %v113 = vunpack.c.l.b16 %v104
  %v114 = vunpack.c.l.b16 %v105
  %v115 = vunpack.c.l.b16 %v106
  %v116 = vunpack.c.l.b16 %v107
  %v117 = vpack.c.b16 %v114, %v113
  %v118 = vpack.c.b16 %v116, %v115
  %vm121 = vcmask 261120
  %v123 = vsel %vm121, %v100, 0
  %v126 = vsel %vm121, %v101, 0
  %v129 = vsel %vm121, %v102, 0
  %v132 = vsel %vm121, %v103, 0
  %134 = vmatpush.bf16.msra.mxu0 0
  %135 = vmatpush.bf16.msra.mxu0 0
  %136 = vmatpush.bf16.msra.mxu0 0
  %137 = vmatpush.bf16.msra.mxu0 0
  %138 = vmatpush.bf16.msra.mxu0 0
  %139 = vmatpush.bf16.msra.mxu0 0
  %140 = vmatpush.bf16.msra.mxu0 %v118
  %141 = vmatpush.bf16.msra.mxu0 %v117
  %142 = vmatmul.bf16.gmra.mxu0 %v123
  %v143 = vpop.f32.mrf.mxu0
  %v144 = vadd.f32 %v108, %v143
  %v145 = vpop.f32.mrf.mxu0
  %v146 = vadd.f32 %v108, %v145
  %147 = vmatmul.bf16.gmra.mxu0 %v126
  %v148 = vpop.f32.mrf.mxu0
  %v149 = vadd.f32 %v108, %v148
  %v150 = vpop.f32.mrf.mxu0
  %v151 = vadd.f32 %v108, %v150
  %152 = vmatmul.bf16.gmra.mxu0 %v129
  %v153 = vpop.f32.mrf.mxu0
  %v154 = vadd.f32 %v108, %v153
  %v155 = vpop.f32.mrf.mxu0
  %v156 = vadd.f32 %v108, %v155
  %157 = vmatmul.bf16.gmra.mxu0 %v132
  %v158 = vpop.f32.mrf.mxu0
  %v159 = vadd.f32 %v108, %v158
  %v160 = vpop.f32.mrf.mxu0
  %v161 = vadd.f32 %v108, %v160
  %162 = vdwg.mxu0
  %167 = vrot.lane.b32.xlu0 %v144, 96
  %v168 = vpop.permute.xlu0 %167
  %169 = vrot.lane.b32.xlu0 %v146, 96
  %v170 = vpop.permute.xlu0 %169
  %171 = vrot.lane.b32.xlu0 %v149, 96
  %v172 = vpop.permute.xlu0 %171
  %173 = vrot.lane.b32.xlu0 %v151, 96
  %v174 = vpop.permute.xlu0 %173
  %v179 = vmul.f32 %v144, %v168
  %v180 = vmul.f32 %v146, %v170
  %v181 = vmul.f32 %v149, %v172
  %v182 = vmul.f32 %v151, %v174
  %v183 = vmul.f32 %v154, %v168
  %v184 = vmul.f32 %v156, %v170
  %v185 = vmul.f32 %v159, %v172
  %v186 = vmul.f32 %v161, %v174
  %v187 = vpack.c.bf16 %v180, %v179
  %v188 = vpack.c.bf16 %v182, %v181
  %v189 = vpack.c.bf16 %v184, %v183
  %v190 = vpack.c.bf16 %v186, %v185
  %v195 = vunpack.c.l.b16 %v28
  %v196 = vunpack.c.l.b16 %v29
  %v197 = vunpack.c.l.b16 %v30
  %v198 = vunpack.c.l.b16 %v31
  %v199 = vpack.c.b16 %v196, %v195
  %v200 = vpack.c.b16 %v198, %v197
  %v204 = vsel %vm121, %v187, 0
  %v207 = vsel %vm121, %v188, 0
  %v210 = vsel %vm121, %v189, 0
  %v213 = vsel %vm121, %v190, 0
  %215 = vmatpush.bf16.msra.mxu0 0
  %216 = vmatpush.bf16.msra.mxu0 0
  %217 = vmatpush.bf16.msra.mxu0 0
  %218 = vmatpush.bf16.msra.mxu0 0
  %219 = vmatpush.bf16.msra.mxu0 0
  %220 = vmatpush.bf16.msra.mxu0 0
  %221 = vmatpush.bf16.msra.mxu0 %v200
  %222 = vmatpush.bf16.msra.mxu0 %v199
  %223 = vmatmul.bf16.gmra.mxu0 %v204
  %v224 = vpop.f32.mrf.mxu0
  %v225 = vadd.f32 0.0, %v224
  %v226 = vpop.f32.mrf.mxu0
  %v227 = vadd.f32 0.0, %v226
  %228 = vmatmul.bf16.gmra.mxu0 %v207
  %v229 = vpop.f32.mrf.mxu0
  %v230 = vadd.f32 0.0, %v229
  %v231 = vpop.f32.mrf.mxu0
  %v232 = vadd.f32 0.0, %v231
  %233 = vmatmul.bf16.gmra.mxu0 %v210
  %v234 = vpop.f32.mrf.mxu0
  %v235 = vadd.f32 0.0, %v234
  %v236 = vpop.f32.mrf.mxu0
  %v237 = vadd.f32 0.0, %v236
  %238 = vmatmul.bf16.gmra.mxu0 %v213
  %v239 = vpop.f32.mrf.mxu0
  %v240 = vadd.f32 0.0, %v239
  %v241 = vpop.f32.mrf.mxu0
  %v242 = vadd.f32 0.0, %v241
  %243 = vdwg.mxu0
  %v244 = vsub.f32 -inf, %v225
  %v245 = vsub.f32 -inf, %v227
  %v246 = vsub.f32 -inf, %v230
  %v247 = vsub.f32 -inf, %v232
  %v248 = vsub.f32 -inf, %v235
  %v249 = vsub.f32 -inf, %v237
  %v250 = vsub.f32 -inf, %v240
  %v251 = vsub.f32 -inf, %v242
  %v252 = vmul.f32 %v244, 1.442695
  %v253 = vpow.pop %v252
  %v254 = vmul.f32 %v245, 1.442695
  %v255 = vpow.pop %v254
  %v256 = vmul.f32 %v246, 1.442695
  %v257 = vpow.pop %v256
  %v258 = vmul.f32 %v247, 1.442695
  %v259 = vpow.pop %v258
  %v260 = vmul.f32 %v248, 1.442695
  %v261 = vpow.pop %v260
  %v262 = vmul.f32 %v249, 1.442695
  %v263 = vpow.pop %v262
  %v264 = vmul.f32 %v250, 1.442695
  %v265 = vpow.pop %v264
  %v266 = vmul.f32 %v251, 1.442695
  %v267 = vpow.pop %v266
  %v268 = vsub.f32 %v225, %v225
  %v269 = vsub.f32 %v227, %v227
  %v270 = vsub.f32 %v230, %v230
  %v271 = vsub.f32 %v232, %v232
  %v272 = vsub.f32 %v235, %v235
  %v273 = vsub.f32 %v237, %v237
  %v274 = vsub.f32 %v240, %v240
  %v275 = vsub.f32 %v242, %v242
  %v276 = vmul.f32 %v268, 1.442695
  %v277 = vpow.pop %v276
  %v278 = vmul.f32 %v269, 1.442695
  %v279 = vpow.pop %v278
  %v280 = vmul.f32 %v270, 1.442695
  %v281 = vpow.pop %v280
  %v282 = vmul.f32 %v271, 1.442695
  %v283 = vpow.pop %v282
  %v284 = vmul.f32 %v272, 1.442695
  %v285 = vpow.pop %v284
  %v286 = vmul.f32 %v273, 1.442695
  %v287 = vpow.pop %v286
  %v288 = vmul.f32 %v274, 1.442695
  %v289 = vpow.pop %v288
  %v290 = vmul.f32 %v275, 1.442695
  %v291 = vpow.pop %v290
  %v292 = vmul.f32 %v253, 0.0
  %v293 = vmul.f32 %v255, 0.0
  %v294 = vmul.f32 %v257, 0.0
  %v295 = vmul.f32 %v259, 0.0
  %v296 = vmul.f32 %v261, 0.0
  %v297 = vmul.f32 %v263, 0.0
  %v298 = vmul.f32 %v265, 0.0
  %v299 = vmul.f32 %v267, 0.0
  %v300 = vadd.f32 %v292, %v277
  %v301 = vadd.f32 %v293, %v279
  %v302 = vadd.f32 %v294, %v281
  %v303 = vadd.f32 %v295, %v283
  %v304 = vadd.f32 %v296, %v285
  %v305 = vadd.f32 %v297, %v287
  %v306 = vadd.f32 %v298, %v289
  %v307 = vadd.f32 %v299, %v291
  %308 = vrot.lane.b32.xlu0 %v144, 64
  %v309 = vpop.permute.xlu0 %308
  %310 = vrot.lane.b32.xlu0 %v146, 64
  %v311 = vpop.permute.xlu0 %310
  %312 = vrot.lane.b32.xlu0 %v149, 64
  %v313 = vpop.permute.xlu0 %312
  %314 = vrot.lane.b32.xlu0 %v151, 64
  %v315 = vpop.permute.xlu0 %314
  %v320 = vmul.f32 %v277, %v309
  %v321 = vmul.f32 %v279, %v311
  %v322 = vmul.f32 %v281, %v313
  %v323 = vmul.f32 %v283, %v315
  %v324 = vmul.f32 %v285, %v309
  %v325 = vmul.f32 %v287, %v311
  %v326 = vmul.f32 %v289, %v313
  %v327 = vmul.f32 %v291, %v315
  %v328 = vadd.f32 %v292, %v320
  %v329 = vadd.f32 %v293, %v321
  %v330 = vadd.f32 %v294, %v322
  %v331 = vadd.f32 %v295, %v323
  %v332 = vadd.f32 %v296, %v324
  %v333 = vadd.f32 %v297, %v325
  %v334 = vadd.f32 %v298, %v326
  %v335 = vadd.f32 %v299, %v327
  %340 = vrot.lane.b32.xlu0 %v154, 96
  %v341 = vpop.permute.xlu0 %340
  %342 = vrot.lane.b32.xlu0 %v156, 96
  %v343 = vpop.permute.xlu0 %342
  %344 = vrot.lane.b32.xlu0 %v159, 96
  %v345 = vpop.permute.xlu0 %344
  %346 = vrot.lane.b32.xlu0 %v161, 96
  %v347 = vpop.permute.xlu0 %346
  %v352 = vmul.f32 %v144, %v341
  %v353 = vmul.f32 %v146, %v343
  %v354 = vmul.f32 %v149, %v345
  %v355 = vmul.f32 %v151, %v347
  %v356 = vmul.f32 %v154, %v341
  %v357 = vmul.f32 %v156, %v343
  %v358 = vmul.f32 %v159, %v345
  %v359 = vmul.f32 %v161, %v347
  %v360 = vpack.c.bf16 %v353, %v352
  %v361 = vpack.c.bf16 %v355, %v354
  %v362 = vpack.c.bf16 %v357, %v356
  %v363 = vpack.c.bf16 %v359, %v358
  %v365 = vsel %vm121, %v360, 0
  %v368 = vsel %vm121, %v361, 0
  %v371 = vsel %vm121, %v362, 0
  %v374 = vsel %vm121, %v363, 0
  %376 = vmatpush.bf16.msra.mxu0 0
  %377 = vmatpush.bf16.msra.mxu0 0
  %378 = vmatpush.bf16.msra.mxu0 0
  %379 = vmatpush.bf16.msra.mxu0 0
  %380 = vmatpush.bf16.msra.mxu0 0
  %381 = vmatpush.bf16.msra.mxu0 0
  %382 = vmatpush.bf16.msra.mxu0 %v200
  %383 = vmatpush.bf16.msra.mxu0 %v199
  %384 = vmatmul.bf16.gmra.mxu0 %v365
  %v385 = vpop.f32.mrf.mxu0
  %v386 = vadd.f32 0.0, %v385
  %v387 = vpop.f32.mrf.mxu0
  %v388 = vadd.f32 0.0, %v387
  %389 = vmatmul.bf16.gmra.mxu0 %v368
  %v390 = vpop.f32.mrf.mxu0
  %v391 = vadd.f32 0.0, %v390
  %v392 = vpop.f32.mrf.mxu0
  %v393 = vadd.f32 0.0, %v392
  %394 = vmatmul.bf16.gmra.mxu0 %v371
  %v395 = vpop.f32.mrf.mxu0
  %v396 = vadd.f32 0.0, %v395
  %v397 = vpop.f32.mrf.mxu0
  %v398 = vadd.f32 0.0, %v397
  %399 = vmatmul.bf16.gmra.mxu0 %v374
  %v400 = vpop.f32.mrf.mxu0
  %v401 = vadd.f32 0.0, %v400
  %v402 = vpop.f32.mrf.mxu0
  %v403 = vadd.f32 0.0, %v402
  %404 = vdwg.mxu0
  %v405 = vmax.f32 %v225, %v386
  %v406 = vmax.f32 %v227, %v388
  %v407 = vmax.f32 %v230, %v391
  %v408 = vmax.f32 %v232, %v393
  %v409 = vmax.f32 %v235, %v396
  %v410 = vmax.f32 %v237, %v398
  %v411 = vmax.f32 %v240, %v401
  %v412 = vmax.f32 %v242, %v403
  %v413 = vsub.f32 %v225, %v405
  %v414 = vsub.f32 %v227, %v406
  %v415 = vsub.f32 %v230, %v407
  %v416 = vsub.f32 %v232, %v408
  %v417 = vsub.f32 %v235, %v409
  %v418 = vsub.f32 %v237, %v410
  %v419 = vsub.f32 %v240, %v411
  %v420 = vsub.f32 %v242, %v412
  %v421 = vmul.f32 %v413, 1.442695
  %v422 = vpow.pop %v421
  %v423 = vmul.f32 %v414, 1.442695
  %v424 = vpow.pop %v423
  %v425 = vmul.f32 %v415, 1.442695
  %v426 = vpow.pop %v425
  %v427 = vmul.f32 %v416, 1.442695
  %v428 = vpow.pop %v427
  %v429 = vmul.f32 %v417, 1.442695
  %v430 = vpow.pop %v429
  %v431 = vmul.f32 %v418, 1.442695
  %v432 = vpow.pop %v431
  %v433 = vmul.f32 %v419, 1.442695
  %v434 = vpow.pop %v433
  %v435 = vmul.f32 %v420, 1.442695
  %v436 = vpow.pop %v435
  %v437 = vsub.f32 %v386, %v405
  %v438 = vsub.f32 %v388, %v406
  %v439 = vsub.f32 %v391, %v407
  %v440 = vsub.f32 %v393, %v408
  %v441 = vsub.f32 %v396, %v409
  %v442 = vsub.f32 %v398, %v410
  %v443 = vsub.f32 %v401, %v411
  %v444 = vsub.f32 %v403, %v412
  %v445 = vmul.f32 %v437, 1.442695
  %v446 = vpow.pop %v445
  %v447 = vmul.f32 %v438, 1.442695
  %v448 = vpow.pop %v447
  %v449 = vmul.f32 %v439, 1.442695
  %v450 = vpow.pop %v449
  %v451 = vmul.f32 %v440, 1.442695
  %v452 = vpow.pop %v451
  %v453 = vmul.f32 %v441, 1.442695
  %v454 = vpow.pop %v453
  %v455 = vmul.f32 %v442, 1.442695
  %v456 = vpow.pop %v455
  %v457 = vmul.f32 %v443, 1.442695
  %v458 = vpow.pop %v457
  %v459 = vmul.f32 %v444, 1.442695
  %v460 = vpow.pop %v459
  %v461 = vmul.f32 %v300, %v422
  %v462 = vmul.f32 %v301, %v424
  %v463 = vmul.f32 %v302, %v426
  %v464 = vmul.f32 %v303, %v428
  %v465 = vmul.f32 %v304, %v430
  %v466 = vmul.f32 %v305, %v432
  %v467 = vmul.f32 %v306, %v434
  %v468 = vmul.f32 %v307, %v436
  %v469 = vadd.f32 %v461, %v446
  %v470 = vadd.f32 %v462, %v448
  %v471 = vadd.f32 %v463, %v450
  %v472 = vadd.f32 %v464, %v452
  %v473 = vadd.f32 %v465, %v454
  %v474 = vadd.f32 %v466, %v456
  %v475 = vadd.f32 %v467, %v458
  %v476 = vadd.f32 %v468, %v460
  %v477 = vmul.f32 %v328, %v422
  %v478 = vmul.f32 %v329, %v424
  %v479 = vmul.f32 %v330, %v426
  %v480 = vmul.f32 %v331, %v428
  %v481 = vmul.f32 %v332, %v430
  %v482 = vmul.f32 %v333, %v432
  %v483 = vmul.f32 %v334, %v434
  %v484 = vmul.f32 %v335, %v436
  %485 = vrot.lane.b32.xlu0 %v154, 64
  %v486 = vpop.permute.xlu0 %485
  %487 = vrot.lane.b32.xlu0 %v156, 64
  %v488 = vpop.permute.xlu0 %487
  %489 = vrot.lane.b32.xlu0 %v159, 64
  %v490 = vpop.permute.xlu0 %489
  %491 = vrot.lane.b32.xlu0 %v161, 64
  %v492 = vpop.permute.xlu0 %491
  %v497 = vmul.f32 %v446, %v486
  %v498 = vmul.f32 %v448, %v488
  %v499 = vmul.f32 %v450, %v490
  %v500 = vmul.f32 %v452, %v492
  %v501 = vmul.f32 %v454, %v486
  %v502 = vmul.f32 %v456, %v488
  %v503 = vmul.f32 %v458, %v490
  %v504 = vmul.f32 %v460, %v492
  %v505 = vadd.f32 %v477, %v497
  %v506 = vadd.f32 %v478, %v498
  %v507 = vadd.f32 %v479, %v499
  %v508 = vadd.f32 %v480, %v500
  %v509 = vadd.f32 %v481, %v501
  %v510 = vadd.f32 %v482, %v502
  %v511 = vadd.f32 %v483, %v503
  %v512 = vadd.f32 %v484, %v504
  %v513 = vrcp.pop %v469
  %v514 = vmul.f32 %v469, %v513
  %v515 = vsub.f32 1.0, %v514
  %v516 = vmul.f32 %v513, %v515
  %v517 = vadd.f32 %v513, %v516
  %vm518 = vweird.f32 %v469
  %vm519 = vweird.f32 %v513
  %vm520 = vmor %vm518, %vm519
  %v521 = vsel %vm520, %v513, %v517
  %v522 = vand.u32 2147483647, %v469
  %vm523 = vcmp.eq.f32.partialorder %v522, 8.507059e+37
  %v524 = vand.u32 %v469, 2147483648
  %v525 = vor.u32 1.1754944e-38, %v524
  %v526 = vsel %vm523, %v525, %v521
  %v527 = vrcp.pop %v470
  %v528 = vmul.f32 %v470, %v527
  %v529 = vsub.f32 1.0, %v528
  %v530 = vmul.f32 %v527, %v529
  %v531 = vadd.f32 %v527, %v530
  %vm532 = vweird.f32 %v470
  %vm533 = vweird.f32 %v527
  %vm534 = vmor %vm532, %vm533
  %v535 = vsel %vm534, %v527, %v531
  %v536 = vand.u32 2147483647, %v470
  %vm537 = vcmp.eq.f32.partialorder %v536, 8.507059e+37
  %v538 = vand.u32 %v470, 2147483648
  %v539 = vor.u32 1.1754944e-38, %v538
  %v540 = vsel %vm537, %v539, %v535
  %v541 = vrcp.pop %v471
  %v542 = vmul.f32 %v471, %v541
  %v543 = vsub.f32 1.0, %v542
  %v544 = vmul.f32 %v541, %v543
  %v545 = vadd.f32 %v541, %v544
  %vm546 = vweird.f32 %v471
  %vm547 = vweird.f32 %v541
  %vm548 = vmor %vm546, %vm547
  %v549 = vsel %vm548, %v541, %v545
  %v550 = vand.u32 2147483647, %v471
  %vm551 = vcmp.eq.f32.partialorder %v550, 8.507059e+37
  %v552 = vand.u32 %v471, 2147483648
  %v553 = vor.u32 1.1754944e-38, %v552
  %v554 = vsel %vm551, %v553, %v549
  %v555 = vrcp.pop %v472
  %v556 = vmul.f32 %v472, %v555
  %v557 = vsub.f32 1.0, %v556
  %v558 = vmul.f32 %v555, %v557
  %v559 = vadd.f32 %v555, %v558
  %vm560 = vweird.f32 %v472
  %vm561 = vweird.f32 %v555
  %vm562 = vmor %vm560, %vm561
  %v563 = vsel %vm562, %v555, %v559
  %v564 = vand.u32 2147483647, %v472
  %vm565 = vcmp.eq.f32.partialorder %v564, 8.507059e+37
  %v566 = vand.u32 %v472, 2147483648
  %v567 = vor.u32 1.1754944e-38, %v566
  %v568 = vsel %vm565, %v567, %v563
  %v569 = vrcp.pop %v473
  %v570 = vmul.f32 %v473, %v569
  %v571 = vsub.f32 1.0, %v570
  %v572 = vmul.f32 %v569, %v571
  %v573 = vadd.f32 %v569, %v572
  %vm574 = vweird.f32 %v473
  %vm575 = vweird.f32 %v569
  %vm576 = vmor %vm574, %vm575
  %v577 = vsel %vm576, %v569, %v573
  %v578 = vand.u32 2147483647, %v473
  %vm579 = vcmp.eq.f32.partialorder %v578, 8.507059e+37
  %v580 = vand.u32 %v473, 2147483648
  %v581 = vor.u32 1.1754944e-38, %v580
  %v582 = vsel %vm579, %v581, %v577
  %v583 = vrcp.pop %v474
  %v584 = vmul.f32 %v474, %v583
  %v585 = vsub.f32 1.0, %v584
  %v586 = vmul.f32 %v583, %v585
  %v587 = vadd.f32 %v583, %v586
  %vm588 = vweird.f32 %v474
  %vm589 = vweird.f32 %v583
  %vm590 = vmor %vm588, %vm589
  %v591 = vsel %vm590, %v583, %v587
  %v592 = vand.u32 2147483647, %v474
  %vm593 = vcmp.eq.f32.partialorder %v592, 8.507059e+37
  %v594 = vand.u32 %v474, 2147483648
  %v595 = vor.u32 1.1754944e-38, %v594
  %v596 = vsel %vm593, %v595, %v591
  %v597 = vrcp.pop %v475
  %v598 = vmul.f32 %v475, %v597
  %v599 = vsub.f32 1.0, %v598
  %v600 = vmul.f32 %v597, %v599
  %v601 = vadd.f32 %v597, %v600
  %vm602 = vweird.f32 %v475
  %vm603 = vweird.f32 %v597
  %vm604 = vmor %vm602, %vm603
  %v605 = vsel %vm604, %v597, %v601
  %v606 = vand.u32 2147483647, %v475
  %vm607 = vcmp.eq.f32.partialorder %v606, 8.507059e+37
  %v608 = vand.u32 %v475, 2147483648
  %v609 = vor.u32 1.1754944e-38, %v608
  %v610 = vsel %vm607, %v609, %v605
  %v611 = vrcp.pop %v476
  %v612 = vmul.f32 %v476, %v611
  %v613 = vsub.f32 1.0, %v612
  %v614 = vmul.f32 %v611, %v613
  %v615 = vadd.f32 %v611, %v614
  %vm616 = vweird.f32 %v476
  %vm617 = vweird.f32 %v611
  %vm618 = vmor %vm616, %vm617
  %v619 = vsel %vm618, %v611, %v615
  %v620 = vand.u32 2147483647, %v476
  %vm621 = vcmp.eq.f32.partialorder %v620, 8.507059e+37
  %v622 = vand.u32 %v476, 2147483648
  %v623 = vor.u32 1.1754944e-38, %v622
  %v624 = vsel %vm621, %v623, %v619
  %v625 = vmul.f32 %v505, %v526
  %v626 = vmul.f32 %v506, %v540
  %v627 = vmul.f32 %v507, %v554
  %v628 = vmul.f32 %v508, %v568
  %v629 = vmul.f32 %v509, %v582
  %v630 = vmul.f32 %v510, %v596
  %v631 = vmul.f32 %v511, %v610
  %v632 = vmul.f32 %v512, %v624
  %v633 = vpack.c.bf16 %v626, %v625
  %v634 = vpack.c.bf16 %v628, %v627
  %v635 = vpack.c.bf16 %v630, %v629
  %v636 = vpack.c.bf16 %v632, %v631
  %v637 = vperm.slane %v27, 1
  %v642 = vunpack.c.l.b16 %v32
  %v643 = vunpack.c.l.b16 %v33
  %v644 = vunpack.c.l.b16 %v34
  %v645 = vunpack.c.l.b16 %v35
  %v646 = vpack.c.b16 %v643, %v642
  %v647 = vpack.c.b16 %v645, %v644
  %v651 = vsel %vm121, %v633, 0
  %v654 = vsel %vm121, %v634, 0
  %v657 = vsel %vm121, %v635, 0
  %v660 = vsel %vm121, %v636, 0
  %662 = vmatpush.bf16.msra.mxu0 0
  %663 = vmatpush.bf16.msra.mxu0 0
  %664 = vmatpush.bf16.msra.mxu0 0
  %665 = vmatpush.bf16.msra.mxu0 0
  %666 = vmatpush.bf16.msra.mxu0 0
  %667 = vmatpush.bf16.msra.mxu0 0
  %668 = vmatpush.bf16.msra.mxu0 %v647
  %669 = vmatpush.bf16.msra.mxu0 %v646
  %670 = vmatmul.bf16.gmra.mxu0 %v651
  %v671 = vpop.f32.mrf.mxu0
  %v672 = vadd.f32 %v637, %v671
  %v673 = vpop.f32.mrf.mxu0
  %v674 = vadd.f32 %v637, %v673
  %675 = vmatmul.bf16.gmra.mxu0 %v654
  %v676 = vpop.f32.mrf.mxu0
  %v677 = vadd.f32 %v637, %v676
  %v678 = vpop.f32.mrf.mxu0
  %v679 = vadd.f32 %v637, %v678
  %680 = vmatmul.bf16.gmra.mxu0 %v657
  %v681 = vpop.f32.mrf.mxu0
  %v682 = vadd.f32 %v637, %v681
  %v683 = vpop.f32.mrf.mxu0
  %v684 = vadd.f32 %v637, %v683
  %685 = vmatmul.bf16.gmra.mxu0 %v660
  %v686 = vpop.f32.mrf.mxu0
  %v687 = vadd.f32 %v637, %v686
  %v688 = vpop.f32.mrf.mxu0
  %v689 = vadd.f32 %v637, %v688
  %690 = vdwg.mxu0
  %v691 = vadd.f32 %v92, %v672
  %v692 = vadd.f32 %v93, %v674
  %v693 = vadd.f32 %v94, %v677
  %v694 = vadd.f32 %v95, %v679
  %v695 = vadd.f32 %v96, %v682
  %v696 = vadd.f32 %v97, %v684
  %v697 = vadd.f32 %v98, %v687
  %v698 = vadd.f32 %v99, %v689
  %v699 = vsel %vm121, %v691, 0.0
  %700 = vadd.xlane.f32.xlu0 %v699
  %v701 = vpop.xlane.xlu0 %700
  %v702 = vsel %vm121, %v692, 0.0
  %703 = vadd.xlane.f32.xlu0 %v702
  %v704 = vpop.xlane.xlu0 %703
  %v705 = vsel %vm121, %v693, 0.0
  %706 = vadd.xlane.f32.xlu0 %v705
  %v707 = vpop.xlane.xlu0 %706
  %v708 = vsel %vm121, %v694, 0.0
  %709 = vadd.xlane.f32.xlu0 %v708
  %v710 = vpop.xlane.xlu0 %709
  %v711 = vsel %vm121, %v695, 0.0
  %712 = vadd.xlane.f32.xlu0 %v711
  %v713 = vpop.xlane.xlu0 %712
  %v714 = vsel %vm121, %v696, 0.0
  %715 = vadd.xlane.f32.xlu0 %v714
  %v716 = vpop.xlane.xlu0 %715
  %v717 = vsel %vm121, %v697, 0.0
  %718 = vadd.xlane.f32.xlu0 %v717
  %v719 = vpop.xlane.xlu0 %718
  %v720 = vsel %vm121, %v698, 0.0
  %721 = vadd.xlane.f32.xlu0 %v720
  %v722 = vpop.xlane.xlu0 %721
  %v723 = vrcp.pop 32.0
  %v724 = vmul.f32 32.0, %v723
  %v725 = vsub.f32 1.0, %v724
  %v726 = vmul.f32 %v723, %v725
  %v727 = vadd.f32 %v723, %v726
  %vm728 = vweird.f32 %v723
  %v729 = vsel %vm728, %v723, %v727
  %v730 = vmul.f32 %v701, %v729
  %v731 = vmul.f32 %v704, %v729
  %v732 = vmul.f32 %v707, %v729
  %v733 = vmul.f32 %v710, %v729
  %v734 = vmul.f32 %v713, %v729
  %v735 = vmul.f32 %v716, %v729
  %v736 = vmul.f32 %v719, %v729
  %v737 = vmul.f32 %v722, %v729
  %v738 = vsub.f32 %v691, %v730
  %v739 = vsub.f32 %v692, %v731
  %v740 = vsub.f32 %v693, %v732
  %v741 = vsub.f32 %v694, %v733
  %v742 = vsub.f32 %v695, %v734
  %v743 = vsub.f32 %v696, %v735
  %v744 = vsub.f32 %v697, %v736
  %v745 = vsub.f32 %v698, %v737
  %v746 = vmul.f32 %v738, %v738
  %v747 = vmul.f32 %v739, %v739
  %v748 = vmul.f32 %v740, %v740
  %v749 = vmul.f32 %v741, %v741
  %v750 = vmul.f32 %v742, %v742
  %v751 = vmul.f32 %v743, %v743
  %v752 = vmul.f32 %v744, %v744
  %v753 = vmul.f32 %v745, %v745
  %v754 = vsel %vm121, %v746, 0.0
  %755 = vadd.xlane.f32.xlu0 %v754
  %v756 = vpop.xlane.xlu0 %755
  %v757 = vsel %vm121, %v747, 0.0
  %758 = vadd.xlane.f32.xlu0 %v757
  %v759 = vpop.xlane.xlu0 %758
  %v760 = vsel %vm121, %v748, 0.0
  %761 = vadd.xlane.f32.xlu0 %v760
  %v762 = vpop.xlane.xlu0 %761
  %v763 = vsel %vm121, %v749, 0.0
  %764 = vadd.xlane.f32.xlu0 %v763
  %v765 = vpop.xlane.xlu0 %764
  %v766 = vsel %vm121, %v750, 0.0
  %767 = vadd.xlane.f32.xlu0 %v766
  %v768 = vpop.xlane.xlu0 %767
  %v769 = vsel %vm121, %v751, 0.0
  %770 = vadd.xlane.f32.xlu0 %v769
  %v771 = vpop.xlane.xlu0 %770
  %v772 = vsel %vm121, %v752, 0.0
  %773 = vadd.xlane.f32.xlu0 %v772
  %v774 = vpop.xlane.xlu0 %773
  %v775 = vsel %vm121, %v753, 0.0
  %776 = vadd.xlane.f32.xlu0 %v775
  %v777 = vpop.xlane.xlu0 %776
  %v778 = vmul.f32 %v756, %v729
  %v779 = vmul.f32 %v759, %v729
  %v780 = vmul.f32 %v762, %v729
  %v781 = vmul.f32 %v765, %v729
  %v782 = vmul.f32 %v768, %v729
  %v783 = vmul.f32 %v771, %v729
  %v784 = vmul.f32 %v774, %v729
  %v785 = vmul.f32 %v777, %v729
  %v786 = vadd.f32 %v778, 1e-05
  %v787 = vadd.f32 %v779, 1e-05
  %v788 = vadd.f32 %v780, 1e-05
  %v789 = vadd.f32 %v781, 1e-05
  %v790 = vadd.f32 %v782, 1e-05
  %v791 = vadd.f32 %v783, 1e-05
  %v792 = vadd.f32 %v784, 1e-05
  %v793 = vadd.f32 %v785, 1e-05
  %v794 = vrsqrt.pop %v786
  %v795 = vmul.f32 %v794, %v786
  %v796 = vmul.f32 %v795, %v794
  %v797 = vmul.f32 0.5, %v796
  %v798 = vsub.f32 1.5, %v797
  %v799 = vmul.f32 %v794, %v798
  %vm800 = vweird.f32 %v786
  %vm801 = vweird.f32 %v794
  %vm802 = vmor %vm800, %vm801
  %v803 = vsel %vm802, %v794, %v799
  %v804 = vrsqrt.pop %v787
  %v805 = vmul.f32 %v804, %v787
  %v806 = vmul.f32 %v805, %v804
  %v807 = vmul.f32 0.5, %v806
  %v808 = vsub.f32 1.5, %v807
  %v809 = vmul.f32 %v804, %v808
  %vm810 = vweird.f32 %v787
  %vm811 = vweird.f32 %v804
  %vm812 = vmor %vm810, %vm811
  %v813 = vsel %vm812, %v804, %v809
  %v814 = vrsqrt.pop %v788
  %v815 = vmul.f32 %v814, %v788
  %v816 = vmul.f32 %v815, %v814
  %v817 = vmul.f32 0.5, %v816
  %v818 = vsub.f32 1.5, %v817
  %v819 = vmul.f32 %v814, %v818
  %vm820 = vweird.f32 %v788
  %vm821 = vweird.f32 %v814
  %vm822 = vmor %vm820, %vm821
  %v823 = vsel %vm822, %v814, %v819
  %v824 = vrsqrt.pop %v789
  %v825 = vmul.f32 %v824, %v789
  %v826 = vmul.f32 %v825, %v824
  %v827 = vmul.f32 0.5, %v826
  %v828 = vsub.f32 1.5, %v827
  %v829 = vmul.f32 %v824, %v828
  %vm830 = vweird.f32 %v789
  %vm831 = vweird.f32 %v824
  %vm832 = vmor %vm830, %vm831
  %v833 = vsel %vm832, %v824, %v829
  %v834 = vrsqrt.pop %v790
  %v835 = vmul.f32 %v834, %v790
  %v836 = vmul.f32 %v835, %v834
  %v837 = vmul.f32 0.5, %v836
  %v838 = vsub.f32 1.5, %v837
  %v839 = vmul.f32 %v834, %v838
  %vm840 = vweird.f32 %v790
  %vm841 = vweird.f32 %v834
  %vm842 = vmor %vm840, %vm841
  %v843 = vsel %vm842, %v834, %v839
  %v844 = vrsqrt.pop %v791
  %v845 = vmul.f32 %v844, %v791
  %v846 = vmul.f32 %v845, %v844
  %v847 = vmul.f32 0.5, %v846
  %v848 = vsub.f32 1.5, %v847
  %v849 = vmul.f32 %v844, %v848
  %vm850 = vweird.f32 %v791
  %vm851 = vweird.f32 %v844
  %vm852 = vmor %vm850, %vm851
  %v853 = vsel %vm852, %v844, %v849
  %v854 = vrsqrt.pop %v792
  %v855 = vmul.f32 %v854, %v792
  %v856 = vmul.f32 %v855, %v854
  %v857 = vmul.f32 0.5, %v856
  %v858 = vsub.f32 1.5, %v857
  %v859 = vmul.f32 %v854, %v858
  %vm860 = vweird.f32 %v792
  %vm861 = vweird.f32 %v854
  %vm862 = vmor %vm860, %vm861
  %v863 = vsel %vm862, %v854, %v859
  %v864 = vrsqrt.pop %v793
  %v865 = vmul.f32 %v864, %v793
  %v866 = vmul.f32 %v865, %v864
  %v867 = vmul.f32 0.5, %v866
  %v868 = vsub.f32 1.5, %v867
  %v869 = vmul.f32 %v864, %v868
  %vm870 = vweird.f32 %v793
  %vm871 = vweird.f32 %v864
  %vm872 = vmor %vm870, %vm871
  %v873 = vsel %vm872, %v864, %v869
  %v874 = vmul.f32 %v738, %v803
  %v875 = vmul.f32 %v739, %v813
  %v876 = vmul.f32 %v740, %v823
  %v877 = vmul.f32 %v741, %v833
  %v878 = vmul.f32 %v742, %v843
  %v879 = vmul.f32 %v743, %v853
  %v880 = vmul.f32 %v744, %v863
  %v881 = vmul.f32 %v745, %v873
  %v882 = vperm.slane %v27, 2
  %v883 = vmul.f32 %v874, %v882
  %v884 = vmul.f32 %v875, %v882
  %v885 = vmul.f32 %v876, %v882
  %v886 = vmul.f32 %v877, %v882
  %v887 = vmul.f32 %v878, %v882
  %v888 = vmul.f32 %v879, %v882
  %v889 = vmul.f32 %v880, %v882
  %v890 = vmul.f32 %v881, %v882
  %v891 = vperm.slane %v27, 3
  %v892 = vadd.f32 %v883, %v891
  %v893 = vadd.f32 %v884, %v891
  %v894 = vadd.f32 %v885, %v891
  %v895 = vadd.f32 %v886, %v891
  %v896 = vadd.f32 %v887, %v891
  %v897 = vadd.f32 %v888, %v891
  %v898 = vadd.f32 %v889, %v891
  %v899 = vadd.f32 %v890, %v891
  %v900 = vpack.c.bf16 %v893, %v892
  %v901 = vpack.c.bf16 %v895, %v894
  %v902 = vpack.c.bf16 %v897, %v896
  %v903 = vpack.c.bf16 %v899, %v898
  %v904 = vld [vmem:[%s4] sm:$0xf]
  %v905 = vld [vmem:[%s4 + $0x4] sm:$0xf]
  %v906 = vld [vmem:[%s4 + $0x8] sm:$0xf]
  %v907 = vld [vmem:[%s4 + $0xc] sm:$0xf]
  %v908 = vperm.slane %v27, 4
  %v913 = vunpack.c.l.b16 %v904
  %v914 = vunpack.c.l.b16 %v905
  %v915 = vunpack.c.l.b16 %v906
  %v916 = vunpack.c.l.b16 %v907
  %v917 = vpack.c.b16 %v914, %v913
  %v918 = vpack.c.b16 %v916, %v915
  %v922 = vsel %vm121, %v900, 0
  %v925 = vsel %vm121, %v901, 0
  %v928 = vsel %vm121, %v902, 0
  %v931 = vsel %vm121, %v903, 0
  %933 = vmatpush.bf16.msra.mxu0 0
  %934 = vmatpush.bf16.msra.mxu0 0
  %935 = vmatpush.bf16.msra.mxu0 0
  %936 = vmatpush.bf16.msra.mxu0 0
  %937 = vmatpush.bf16.msra.mxu0 0
  %938 = vmatpush.bf16.msra.mxu0 0
  %939 = vmatpush.bf16.msra.mxu0 %v918
  %940 = vmatpush.bf16.msra.mxu0 %v917
  %941 = vmatmul.bf16.gmra.mxu0 %v922
  %v942 = vpop.f32.mrf.mxu0
  %v943 = vadd.f32 %v908, %v942
  %v944 = vpop.f32.mrf.mxu0
  %v945 = vadd.f32 %v908, %v944
  %946 = vmatmul.bf16.gmra.mxu0 %v925
  %v947 = vpop.f32.mrf.mxu0
  %v948 = vadd.f32 %v908, %v947
  %v949 = vpop.f32.mrf.mxu0
  %v950 = vadd.f32 %v908, %v949
  %951 = vmatmul.bf16.gmra.mxu0 %v928
  %v952 = vpop.f32.mrf.mxu0
  %v953 = vadd.f32 %v908, %v952
  %v954 = vpop.f32.mrf.mxu0
  %v955 = vadd.f32 %v908, %v954
  %956 = vmatmul.bf16.gmra.mxu0 %v931
  %v957 = vpop.f32.mrf.mxu0
  %v958 = vadd.f32 %v908, %v957
  %v959 = vpop.f32.mrf.mxu0
  %v960 = vadd.f32 %v908, %v959
  %961 = vdwg.mxu0
  %v962 = vmul.f32 %v943, 0.5
  %v963 = vmul.f32 %v945, 0.5
  %v964 = vmul.f32 %v948, 0.5
  %v965 = vmul.f32 %v950, 0.5
  %v966 = vmul.f32 %v953, 0.5
  %v967 = vmul.f32 %v955, 0.5
  %v968 = vmul.f32 %v958, 0.5
  %v969 = vmul.f32 %v960, 0.5
  %v970 = vmul.f32 %v943, 0.70710677
  %v971 = vmul.f32 %v945, 0.70710677
  %v972 = vmul.f32 %v948, 0.70710677
  %v973 = vmul.f32 %v950, 0.70710677
  %v974 = vmul.f32 %v953, 0.70710677
  %v975 = vmul.f32 %v955, 0.70710677
  %v976 = vmul.f32 %v958, 0.70710677
  %v977 = vmul.f32 %v960, 0.70710677
  %vm978 = vcmp.lt.f32.partialorder %v970, 0.0
  %vm979 = vcmp.lt.f32.partialorder %v971, 0.0
  %vm980 = vcmp.lt.f32.partialorder %v972, 0.0
  %vm981 = vcmp.lt.f32.partialorder %v973, 0.0
  %vm982 = vcmp.lt.f32.partialorder %v974, 0.0
  %vm983 = vcmp.lt.f32.partialorder %v975, 0.0
  %vm984 = vcmp.lt.f32.partialorder %v976, 0.0
  %vm985 = vcmp.lt.f32.partialorder %v977, 0.0
  %v986 = vsel %vm978, -1.0, 1.0
  %v987 = vsel %vm979, -1.0, 1.0
  %v988 = vsel %vm980, -1.0, 1.0
  %v989 = vsel %vm981, -1.0, 1.0
  %v990 = vsel %vm982, -1.0, 1.0
  %v991 = vsel %vm983, -1.0, 1.0
  %v992 = vsel %vm984, -1.0, 1.0
  %v993 = vsel %vm985, -1.0, 1.0
  %v994 = vand.u32 2147483647, %v970
  %v995 = vand.u32 2147483647, %v971
  %v996 = vand.u32 2147483647, %v972
  %v997 = vand.u32 2147483647, %v973
  %v998 = vand.u32 2147483647, %v974
  %v999 = vand.u32 2147483647, %v975
  %v1000 = vand.u32 2147483647, %v976
  %v1001 = vand.u32 2147483647, %v977
  %v1002 = vmul.f32 %v994, 0.3275911
  %v1003 = vmul.f32 %v995, 0.3275911
  %v1004 = vmul.f32 %v996, 0.3275911
  %v1005 = vmul.f32 %v997, 0.3275911
  %v1006 = vmul.f32 %v998, 0.3275911
  %v1007 = vmul.f32 %v999, 0.3275911
  %v1008 = vmul.f32 %v1000, 0.3275911
  %v1009 = vmul.f32 %v1001, 0.3275911
  %v1010 = vadd.f32 %v1002, 1.0
  %v1011 = vadd.f32 %v1003, 1.0
  %v1012 = vadd.f32 %v1004, 1.0
  %v1013 = vadd.f32 %v1005, 1.0
  %v1014 = vadd.f32 %v1006, 1.0
  %v1015 = vadd.f32 %v1007, 1.0
  %v1016 = vadd.f32 %v1008, 1.0
  %v1017 = vadd.f32 %v1009, 1.0
  %v1018 = vrcp.pop %v1010
  %v1019 = vmul.f32 %v1010, %v1018
  %v1020 = vsub.f32 1.0, %v1019
  %v1021 = vmul.f32 %v1018, %v1020
  %v1022 = vadd.f32 %v1018, %v1021
  %vm1023 = vweird.f32 %v1010
  %vm1024 = vweird.f32 %v1018
  %vm1025 = vmor %vm1023, %vm1024
  %v1026 = vsel %vm1025, %v1018, %v1022
  %v1027 = vand.u32 2147483647, %v1010
  %vm1028 = vcmp.eq.f32.partialorder %v1027, 8.507059e+37
  %v1029 = vand.u32 %v1010, 2147483648
  %v1030 = vor.u32 1.1754944e-38, %v1029
  %v1031 = vsel %vm1028, %v1030, %v1026
  %v1032 = vmul.f32 1.0, %v1031
  %v1033 = vrcp.pop %v1011
  %v1034 = vmul.f32 %v1011, %v1033
  %v1035 = vsub.f32 1.0, %v1034
  %v1036 = vmul.f32 %v1033, %v1035
  %v1037 = vadd.f32 %v1033, %v1036
  %vm1038 = vweird.f32 %v1011
  %vm1039 = vweird.f32 %v1033
  %vm1040 = vmor %vm1038, %vm1039
  %v1041 = vsel %vm1040, %v1033, %v1037
  %v1042 = vand.u32 2147483647, %v1011
  %vm1043 = vcmp.eq.f32.partialorder %v1042, 8.507059e+37
  %v1044 = vand.u32 %v1011, 2147483648
  %v1045 = vor.u32 1.1754944e-38, %v1044
  %v1046 = vsel %vm1043, %v1045, %v1041
  %v1047 = vmul.f32 1.0, %v1046
  %v1048 = vrcp.pop %v1012
  %v1049 = vmul.f32 %v1012, %v1048
  %v1050 = vsub.f32 1.0, %v1049
  %v1051 = vmul.f32 %v1048, %v1050
  %v1052 = vadd.f32 %v1048, %v1051
  %vm1053 = vweird.f32 %v1012
  %vm1054 = vweird.f32 %v1048
  %vm1055 = vmor %vm1053, %vm1054
  %v1056 = vsel %vm1055, %v1048, %v1052
  %v1057 = vand.u32 2147483647, %v1012
  %vm1058 = vcmp.eq.f32.partialorder %v1057, 8.507059e+37
  %v1059 = vand.u32 %v1012, 2147483648
  %v1060 = vor.u32 1.1754944e-38, %v1059
  %v1061 = vsel %vm1058, %v1060, %v1056
  %v1062 = vmul.f32 1.0, %v1061
  %v1063 = vrcp.pop %v1013
  %v1064 = vmul.f32 %v1013, %v1063
  %v1065 = vsub.f32 1.0, %v1064
  %v1066 = vmul.f32 %v1063, %v1065
  %v1067 = vadd.f32 %v1063, %v1066
  %vm1068 = vweird.f32 %v1013
  %vm1069 = vweird.f32 %v1063
  %vm1070 = vmor %vm1068, %vm1069
  %v1071 = vsel %vm1070, %v1063, %v1067
  %v1072 = vand.u32 2147483647, %v1013
  %vm1073 = vcmp.eq.f32.partialorder %v1072, 8.507059e+37
  %v1074 = vand.u32 %v1013, 2147483648
  %v1075 = vor.u32 1.1754944e-38, %v1074
  %v1076 = vsel %vm1073, %v1075, %v1071
  %v1077 = vmul.f32 1.0, %v1076
  %v1078 = vrcp.pop %v1014
  %v1079 = vmul.f32 %v1014, %v1078
  %v1080 = vsub.f32 1.0, %v1079
  %v1081 = vmul.f32 %v1078, %v1080
  %v1082 = vadd.f32 %v1078, %v1081
  %vm1083 = vweird.f32 %v1014
  %vm1084 = vweird.f32 %v1078
  %vm1085 = vmor %vm1083, %vm1084
  %v1086 = vsel %vm1085, %v1078, %v1082
  %v1087 = vand.u32 2147483647, %v1014
  %vm1088 = vcmp.eq.f32.partialorder %v1087, 8.507059e+37
  %v1089 = vand.u32 %v1014, 2147483648
  %v1090 = vor.u32 1.1754944e-38, %v1089
  %v1091 = vsel %vm1088, %v1090, %v1086
  %v1092 = vmul.f32 1.0, %v1091
  %v1093 = vrcp.pop %v1015
  %v1094 = vmul.f32 %v1015, %v1093
  %v1095 = vsub.f32 1.0, %v1094
  %v1096 = vmul.f32 %v1093, %v1095
  %v1097 = vadd.f32 %v1093, %v1096
  %vm1098 = vweird.f32 %v1015
  %vm1099 = vweird.f32 %v1093
  %vm1100 = vmor %vm1098, %vm1099
  %v1101 = vsel %vm1100, %v1093, %v1097
  %v1102 = vand.u32 2147483647, %v1015
  %vm1103 = vcmp.eq.f32.partialorder %v1102, 8.507059e+37
  %v1104 = vand.u32 %v1015, 2147483648
  %v1105 = vor.u32 1.1754944e-38, %v1104
  %v1106 = vsel %vm1103, %v1105, %v1101
  %v1107 = vmul.f32 1.0, %v1106
  %v1108 = vrcp.pop %v1016
  %v1109 = vmul.f32 %v1016, %v1108
  %v1110 = vsub.f32 1.0, %v1109
  %v1111 = vmul.f32 %v1108, %v1110
  %v1112 = vadd.f32 %v1108, %v1111
  %vm1113 = vweird.f32 %v1016
  %vm1114 = vweird.f32 %v1108
  %vm1115 = vmor %vm1113, %vm1114
  %v1116 = vsel %vm1115, %v1108, %v1112
  %v1117 = vand.u32 2147483647, %v1016
  %vm1118 = vcmp.eq.f32.partialorder %v1117, 8.507059e+37
  %v1119 = vand.u32 %v1016, 2147483648
  %v1120 = vor.u32 1.1754944e-38, %v1119
  %v1121 = vsel %vm1118, %v1120, %v1116
  %v1122 = vmul.f32 1.0, %v1121
  %v1123 = vrcp.pop %v1017
  %v1124 = vmul.f32 %v1017, %v1123
  %v1125 = vsub.f32 1.0, %v1124
  %v1126 = vmul.f32 %v1123, %v1125
  %v1127 = vadd.f32 %v1123, %v1126
  %vm1128 = vweird.f32 %v1017
  %vm1129 = vweird.f32 %v1123
  %vm1130 = vmor %vm1128, %vm1129
  %v1131 = vsel %vm1130, %v1123, %v1127
  %v1132 = vand.u32 2147483647, %v1017
  %vm1133 = vcmp.eq.f32.partialorder %v1132, 8.507059e+37
  %v1134 = vand.u32 %v1017, 2147483648
  %v1135 = vor.u32 1.1754944e-38, %v1134
  %v1136 = vsel %vm1133, %v1135, %v1131
  %v1137 = vmul.f32 1.0, %v1136
  %v1138 = vmul.f32 %v1032, 1.0614054
  %v1139 = vmul.f32 %v1047, 1.0614054
  %v1140 = vmul.f32 %v1062, 1.0614054
  %v1141 = vmul.f32 %v1077, 1.0614054
  %v1142 = vmul.f32 %v1092, 1.0614054
  %v1143 = vmul.f32 %v1107, 1.0614054
  %v1144 = vmul.f32 %v1122, 1.0614054
  %v1145 = vmul.f32 %v1137, 1.0614054
  %v1146 = vadd.f32 %v1138, -1.4531521
  %v1147 = vadd.f32 %v1139, -1.4531521
  %v1148 = vadd.f32 %v1140, -1.4531521
  %v1149 = vadd.f32 %v1141, -1.4531521
  %v1150 = vadd.f32 %v1142, -1.4531521
  %v1151 = vadd.f32 %v1143, -1.4531521
  %v1152 = vadd.f32 %v1144, -1.4531521
  %v1153 = vadd.f32 %v1145, -1.4531521
  %v1154 = vmul.f32 %v1146, %v1032
  %v1155 = vmul.f32 %v1147, %v1047
  %v1156 = vmul.f32 %v1148, %v1062
  %v1157 = vmul.f32 %v1149, %v1077
  %v1158 = vmul.f32 %v1150, %v1092
  %v1159 = vmul.f32 %v1151, %v1107
  %v1160 = vmul.f32 %v1152, %v1122
  %v1161 = vmul.f32 %v1153, %v1137
  %v1162 = vadd.f32 %v1154, 1.4214138
  %v1163 = vadd.f32 %v1155, 1.4214138
  %v1164 = vadd.f32 %v1156, 1.4214138
  %v1165 = vadd.f32 %v1157, 1.4214138
  %v1166 = vadd.f32 %v1158, 1.4214138
  %v1167 = vadd.f32 %v1159, 1.4214138
  %v1168 = vadd.f32 %v1160, 1.4214138
  %v1169 = vadd.f32 %v1161, 1.4214138
  %v1170 = vmul.f32 %v1162, %v1032
  %v1171 = vmul.f32 %v1163, %v1047
  %v1172 = vmul.f32 %v1164, %v1062
  %v1173 = vmul.f32 %v1165, %v1077
  %v1174 = vmul.f32 %v1166, %v1092
  %v1175 = vmul.f32 %v1167, %v1107
  %v1176 = vmul.f32 %v1168, %v1122
  %v1177 = vmul.f32 %v1169, %v1137
  %v1178 = vadd.f32 %v1170, -0.28449672
  %v1179 = vadd.f32 %v1171, -0.28449672
  %v1180 = vadd.f32 %v1172, -0.28449672
  %v1181 = vadd.f32 %v1173, -0.28449672
  %v1182 = vadd.f32 %v1174, -0.28449672
  %v1183 = vadd.f32 %v1175, -0.28449672
  %v1184 = vadd.f32 %v1176, -0.28449672
  %v1185 = vadd.f32 %v1177, -0.28449672
  %v1186 = vmul.f32 %v1178, %v1032
  %v1187 = vmul.f32 %v1179, %v1047
  %v1188 = vmul.f32 %v1180, %v1062
  %v1189 = vmul.f32 %v1181, %v1077
  %v1190 = vmul.f32 %v1182, %v1092
  %v1191 = vmul.f32 %v1183, %v1107
  %v1192 = vmul.f32 %v1184, %v1122
  %v1193 = vmul.f32 %v1185, %v1137
  %v1194 = vadd.f32 %v1186, 0.2548296
  %v1195 = vadd.f32 %v1187, 0.2548296
  %v1196 = vadd.f32 %v1188, 0.2548296
  %v1197 = vadd.f32 %v1189, 0.2548296
  %v1198 = vadd.f32 %v1190, 0.2548296
  %v1199 = vadd.f32 %v1191, 0.2548296
  %v1200 = vadd.f32 %v1192, 0.2548296
  %v1201 = vadd.f32 %v1193, 0.2548296
  %v1202 = vmul.f32 %v1194, %v1032
  %v1203 = vmul.f32 %v1195, %v1047
  %v1204 = vmul.f32 %v1196, %v1062
  %v1205 = vmul.f32 %v1197, %v1077
  %v1206 = vmul.f32 %v1198, %v1092
  %v1207 = vmul.f32 %v1199, %v1107
  %v1208 = vmul.f32 %v1200, %v1122
  %v1209 = vmul.f32 %v1201, %v1137
  %v1210 = vsub.f32 0.0, %v994
  %v1211 = vsub.f32 0.0, %v995
  %v1212 = vsub.f32 0.0, %v996
  %v1213 = vsub.f32 0.0, %v997
  %v1214 = vsub.f32 0.0, %v998
  %v1215 = vsub.f32 0.0, %v999
  %v1216 = vsub.f32 0.0, %v1000
  %v1217 = vsub.f32 0.0, %v1001
  %v1218 = vmul.f32 %v1210, %v994
  %v1219 = vmul.f32 %v1211, %v995
  %v1220 = vmul.f32 %v1212, %v996
  %v1221 = vmul.f32 %v1213, %v997
  %v1222 = vmul.f32 %v1214, %v998
  %v1223 = vmul.f32 %v1215, %v999
  %v1224 = vmul.f32 %v1216, %v1000
  %v1225 = vmul.f32 %v1217, %v1001
  %v1226 = vmul.f32 %v1218, 1.442695
  %v1227 = vpow.pop %v1226
  %v1228 = vmul.f32 %v1219, 1.442695
  %v1229 = vpow.pop %v1228
  %v1230 = vmul.f32 %v1220, 1.442695
  %v1231 = vpow.pop %v1230
  %v1232 = vmul.f32 %v1221, 1.442695
  %v1233 = vpow.pop %v1232
  %v1234 = vmul.f32 %v1222, 1.442695
  %v1235 = vpow.pop %v1234
  %v1236 = vmul.f32 %v1223, 1.442695
  %v1237 = vpow.pop %v1236
  %v1238 = vmul.f32 %v1224, 1.442695
  %v1239 = vpow.pop %v1238
  %v1240 = vmul.f32 %v1225, 1.442695
  %v1241 = vpow.pop %v1240
  %v1242 = vmul.f32 %v1202, %v1227
  %v1243 = vmul.f32 %v1203, %v1229
  %v1244 = vmul.f32 %v1204, %v1231
  %v1245 = vmul.f32 %v1205, %v1233
  %v1246 = vmul.f32 %v1206, %v1235
  %v1247 = vmul.f32 %v1207, %v1237
  %v1248 = vmul.f32 %v1208, %v1239
  %v1249 = vmul.f32 %v1209, %v1241
  %v1250 = vsub.f32 1.0, %v1242
  %v1251 = vsub.f32 1.0, %v1243
  %v1252 = vsub.f32 1.0, %v1244
  %v1253 = vsub.f32 1.0, %v1245
  %v1254 = vsub.f32 1.0, %v1246
  %v1255 = vsub.f32 1.0, %v1247
  %v1256 = vsub.f32 1.0, %v1248
  %v1257 = vsub.f32 1.0, %v1249
  %v1258 = vmul.f32 %v986, %v1250
  %v1259 = vmul.f32 %v987, %v1251
  %v1260 = vmul.f32 %v988, %v1252
  %v1261 = vmul.f32 %v989, %v1253
  %v1262 = vmul.f32 %v990, %v1254
  %v1263 = vmul.f32 %v991, %v1255
  %v1264 = vmul.f32 %v992, %v1256
  %v1265 = vmul.f32 %v993, %v1257
  %v1266 = vadd.f32 %v1258, 1.0
  %v1267 = vadd.f32 %v1259, 1.0
  %v1268 = vadd.f32 %v1260, 1.0
  %v1269 = vadd.f32 %v1261, 1.0
  %v1270 = vadd.f32 %v1262, 1.0
  %v1271 = vadd.f32 %v1263, 1.0
  %v1272 = vadd.f32 %v1264, 1.0
  %v1273 = vadd.f32 %v1265, 1.0
  %v1274 = vmul.f32 %v962, %v1266
  %v1275 = vmul.f32 %v963, %v1267
  %v1276 = vmul.f32 %v964, %v1268
  %v1277 = vmul.f32 %v965, %v1269
  %v1278 = vmul.f32 %v966, %v1270
  %v1279 = vmul.f32 %v967, %v1271
  %v1280 = vmul.f32 %v968, %v1272
  %v1281 = vmul.f32 %v969, %v1273
  %v1282 = vpack.c.bf16 %v1275, %v1274
  %v1283 = vpack.c.bf16 %v1277, %v1276
  %v1284 = vpack.c.bf16 %v1279, %v1278
  %v1285 = vpack.c.bf16 %v1281, %v1280
  %v1286 = vld [vmem:[%s5] sm:$0xf]
  %v1287 = vld [vmem:[%s5 + $0x4] sm:$0xf]
  %v1288 = vld [vmem:[%s5 + $0x8] sm:$0xf]
  %v1289 = vld [vmem:[%s5 + $0xc] sm:$0xf]
  %v1290 = vld [vmem:[%s5 + $0x10] sm:$0xf]
  %v1291 = vld [vmem:[%s5 + $0x14] sm:$0xf]
  %v1292 = vld [vmem:[%s5 + $0x18] sm:$0xf]
  %v1293 = vld [vmem:[%s5 + $0x1c] sm:$0xf]
  %v1294 = vperm.slane %v27, 5
  %v1303 = vunpack.c.l.b16 %v1286
  %v1304 = vunpack.c.l.b16 %v1287
  %v1305 = vunpack.c.l.b16 %v1288
  %v1306 = vunpack.c.l.b16 %v1289
  %v1307 = vunpack.c.l.b16 %v1290
  %v1308 = vunpack.c.l.b16 %v1291
  %v1309 = vunpack.c.l.b16 %v1292
  %v1310 = vunpack.c.l.b16 %v1293
  %v1311 = vpack.c.b16 %v1304, %v1303
  %v1312 = vpack.c.b16 %v1306, %v1305
  %v1313 = vpack.c.b16 %v1308, %v1307
  %v1314 = vpack.c.b16 %v1310, %v1309
  %vm1319 = vcmask 523264
  %v1321 = vsel %vm1319, %v1282, 0
  %v1324 = vsel %vm1319, %v1283, 0
  %v1327 = vsel %vm1319, %v1284, 0
  %v1330 = vsel %vm1319, %v1285, 0
  %1332 = vmatpush.bf16.msra.mxu0 0
  %1333 = vmatpush.bf16.msra.mxu0 0
  %1334 = vmatpush.bf16.msra.mxu0 0
  %1335 = vmatpush.bf16.msra.mxu0 0
  %1336 = vmatpush.bf16.msra.mxu0 %v1314
  %1337 = vmatpush.bf16.msra.mxu0 %v1313
  %1338 = vmatpush.bf16.msra.mxu0 %v1312
  %1339 = vmatpush.bf16.msra.mxu0 %v1311
  %1340 = vmatmul.bf16.gmra.mxu0 %v1321
  %v1341 = vpop.f32.mrf.mxu0
  %v1342 = vadd.f32 %v1294, %v1341
  %v1343 = vpop.f32.mrf.mxu0
  %v1344 = vadd.f32 %v1294, %v1343
  %1345 = vmatmul.bf16.gmra.mxu0 %v1324
  %v1346 = vpop.f32.mrf.mxu0
  %v1347 = vadd.f32 %v1294, %v1346
  %v1348 = vpop.f32.mrf.mxu0
  %v1349 = vadd.f32 %v1294, %v1348
  %1350 = vmatmul.bf16.gmra.mxu0 %v1327
  %v1351 = vpop.f32.mrf.mxu0
  %v1352 = vadd.f32 %v1294, %v1351
  %v1353 = vpop.f32.mrf.mxu0
  %v1354 = vadd.f32 %v1294, %v1353
  %1355 = vmatmul.bf16.gmra.mxu0 %v1330
  %v1356 = vpop.f32.mrf.mxu0
  %v1357 = vadd.f32 %v1294, %v1356
  %v1358 = vpop.f32.mrf.mxu0
  %v1359 = vadd.f32 %v1294, %v1358
  %1360 = vdwg.mxu0
  %v1361 = vadd.f32 %v892, %v1342
  %v1362 = vadd.f32 %v893, %v1344
  %v1363 = vadd.f32 %v894, %v1347
  %v1364 = vadd.f32 %v895, %v1349
  %v1365 = vadd.f32 %v896, %v1352
  %v1366 = vadd.f32 %v897, %v1354
  %v1367 = vadd.f32 %v898, %v1357
  %v1368 = vadd.f32 %v899, %v1359
  %v1369 = vsel %vm121, %v1361, 0.0
  %1370 = vadd.xlane.f32.xlu0 %v1369
  %v1371 = vpop.xlane.xlu0 %1370
  %v1372 = vsel %vm121, %v1362, 0.0
  %1373 = vadd.xlane.f32.xlu0 %v1372
  %v1374 = vpop.xlane.xlu0 %1373
  %v1375 = vsel %vm121, %v1363, 0.0
  %1376 = vadd.xlane.f32.xlu0 %v1375
  %v1377 = vpop.xlane.xlu0 %1376
  %v1378 = vsel %vm121, %v1364, 0.0
  %1379 = vadd.xlane.f32.xlu0 %v1378
  %v1380 = vpop.xlane.xlu0 %1379
  %v1381 = vsel %vm121, %v1365, 0.0
  %1382 = vadd.xlane.f32.xlu0 %v1381
  %v1383 = vpop.xlane.xlu0 %1382
  %v1384 = vsel %vm121, %v1366, 0.0
  %1385 = vadd.xlane.f32.xlu0 %v1384
  %v1386 = vpop.xlane.xlu0 %1385
  %v1387 = vsel %vm121, %v1367, 0.0
  %1388 = vadd.xlane.f32.xlu0 %v1387
  %v1389 = vpop.xlane.xlu0 %1388
  %v1390 = vsel %vm121, %v1368, 0.0
  %1391 = vadd.xlane.f32.xlu0 %v1390
  %v1392 = vpop.xlane.xlu0 %1391
  %v1393 = vmul.f32 %v1371, %v729
  %v1394 = vmul.f32 %v1374, %v729
  %v1395 = vmul.f32 %v1377, %v729
  %v1396 = vmul.f32 %v1380, %v729
  %v1397 = vmul.f32 %v1383, %v729
  %v1398 = vmul.f32 %v1386, %v729
  %v1399 = vmul.f32 %v1389, %v729
  %v1400 = vmul.f32 %v1392, %v729
  %v1401 = vsub.f32 %v1361, %v1393
  %v1402 = vsub.f32 %v1362, %v1394
  %v1403 = vsub.f32 %v1363, %v1395
  %v1404 = vsub.f32 %v1364, %v1396
  %v1405 = vsub.f32 %v1365, %v1397
  %v1406 = vsub.f32 %v1366, %v1398
  %v1407 = vsub.f32 %v1367, %v1399
  %v1408 = vsub.f32 %v1368, %v1400
  %v1409 = vmul.f32 %v1401, %v1401
  %v1410 = vmul.f32 %v1402, %v1402
  %v1411 = vmul.f32 %v1403, %v1403
  %v1412 = vmul.f32 %v1404, %v1404
  %v1413 = vmul.f32 %v1405, %v1405
  %v1414 = vmul.f32 %v1406, %v1406
  %v1415 = vmul.f32 %v1407, %v1407
  %v1416 = vmul.f32 %v1408, %v1408
  %v1417 = vsel %vm121, %v1409, 0.0
  %1418 = vadd.xlane.f32.xlu0 %v1417
  %v1419 = vpop.xlane.xlu0 %1418
  %v1420 = vsel %vm121, %v1410, 0.0
  %1421 = vadd.xlane.f32.xlu0 %v1420
  %v1422 = vpop.xlane.xlu0 %1421
  %v1423 = vsel %vm121, %v1411, 0.0
  %1424 = vadd.xlane.f32.xlu0 %v1423
  %v1425 = vpop.xlane.xlu0 %1424
  %v1426 = vsel %vm121, %v1412, 0.0
  %1427 = vadd.xlane.f32.xlu0 %v1426
  %v1428 = vpop.xlane.xlu0 %1427
  %v1429 = vsel %vm121, %v1413, 0.0
  %1430 = vadd.xlane.f32.xlu0 %v1429
  %v1431 = vpop.xlane.xlu0 %1430
  %v1432 = vsel %vm121, %v1414, 0.0
  %1433 = vadd.xlane.f32.xlu0 %v1432
  %v1434 = vpop.xlane.xlu0 %1433
  %v1435 = vsel %vm121, %v1415, 0.0
  %1436 = vadd.xlane.f32.xlu0 %v1435
  %v1437 = vpop.xlane.xlu0 %1436
  %v1438 = vsel %vm121, %v1416, 0.0
  %1439 = vadd.xlane.f32.xlu0 %v1438
  %v1440 = vpop.xlane.xlu0 %1439
  %v1441 = vmul.f32 %v1419, %v729
  %v1442 = vmul.f32 %v1422, %v729
  %v1443 = vmul.f32 %v1425, %v729
  %v1444 = vmul.f32 %v1428, %v729
  %v1445 = vmul.f32 %v1431, %v729
  %v1446 = vmul.f32 %v1434, %v729
  %v1447 = vmul.f32 %v1437, %v729
  %v1448 = vmul.f32 %v1440, %v729
  %v1449 = vadd.f32 %v1441, 1e-05
  %v1450 = vadd.f32 %v1442, 1e-05
  %v1451 = vadd.f32 %v1443, 1e-05
  %v1452 = vadd.f32 %v1444, 1e-05
  %v1453 = vadd.f32 %v1445, 1e-05
  %v1454 = vadd.f32 %v1446, 1e-05
  %v1455 = vadd.f32 %v1447, 1e-05
  %v1456 = vadd.f32 %v1448, 1e-05
  %v1457 = vrsqrt.pop %v1449
  %v1458 = vmul.f32 %v1457, %v1449
  %v1459 = vmul.f32 %v1458, %v1457
  %v1460 = vmul.f32 0.5, %v1459
  %v1461 = vsub.f32 1.5, %v1460
  %v1462 = vmul.f32 %v1457, %v1461
  %vm1463 = vweird.f32 %v1449
  %vm1464 = vweird.f32 %v1457
  %vm1465 = vmor %vm1463, %vm1464
  %v1466 = vsel %vm1465, %v1457, %v1462
  %v1467 = vrsqrt.pop %v1450
  %v1468 = vmul.f32 %v1467, %v1450
  %v1469 = vmul.f32 %v1468, %v1467
  %v1470 = vmul.f32 0.5, %v1469
  %v1471 = vsub.f32 1.5, %v1470
  %v1472 = vmul.f32 %v1467, %v1471
  %vm1473 = vweird.f32 %v1450
  %vm1474 = vweird.f32 %v1467
  %vm1475 = vmor %vm1473, %vm1474
  %v1476 = vsel %vm1475, %v1467, %v1472
  %v1477 = vrsqrt.pop %v1451
  %v1478 = vmul.f32 %v1477, %v1451
  %v1479 = vmul.f32 %v1478, %v1477
  %v1480 = vmul.f32 0.5, %v1479
  %v1481 = vsub.f32 1.5, %v1480
  %v1482 = vmul.f32 %v1477, %v1481
  %vm1483 = vweird.f32 %v1451
  %vm1484 = vweird.f32 %v1477
  %vm1485 = vmor %vm1483, %vm1484
  %v1486 = vsel %vm1485, %v1477, %v1482
  %v1487 = vrsqrt.pop %v1452
  %v1488 = vmul.f32 %v1487, %v1452
  %v1489 = vmul.f32 %v1488, %v1487
  %v1490 = vmul.f32 0.5, %v1489
  %v1491 = vsub.f32 1.5, %v1490
  %v1492 = vmul.f32 %v1487, %v1491
  %vm1493 = vweird.f32 %v1452
  %vm1494 = vweird.f32 %v1487
  %vm1495 = vmor %vm1493, %vm1494
  %v1496 = vsel %vm1495, %v1487, %v1492
  %v1497 = vrsqrt.pop %v1453
  %v1498 = vmul.f32 %v1497, %v1453
  %v1499 = vmul.f32 %v1498, %v1497
  %v1500 = vmul.f32 0.5, %v1499
  %v1501 = vsub.f32 1.5, %v1500
  %v1502 = vmul.f32 %v1497, %v1501
  %vm1503 = vweird.f32 %v1453
  %vm1504 = vweird.f32 %v1497
  %vm1505 = vmor %vm1503, %vm1504
  %v1506 = vsel %vm1505, %v1497, %v1502
  %v1507 = vrsqrt.pop %v1454
  %v1508 = vmul.f32 %v1507, %v1454
  %v1509 = vmul.f32 %v1508, %v1507
  %v1510 = vmul.f32 0.5, %v1509
  %v1511 = vsub.f32 1.5, %v1510
  %v1512 = vmul.f32 %v1507, %v1511
  %vm1513 = vweird.f32 %v1454
  %vm1514 = vweird.f32 %v1507
  %vm1515 = vmor %vm1513, %vm1514
  %v1516 = vsel %vm1515, %v1507, %v1512
  %v1517 = vrsqrt.pop %v1455
  %v1518 = vmul.f32 %v1517, %v1455
  %v1519 = vmul.f32 %v1518, %v1517
  %v1520 = vmul.f32 0.5, %v1519
  %v1521 = vsub.f32 1.5, %v1520
  %v1522 = vmul.f32 %v1517, %v1521
  %vm1523 = vweird.f32 %v1455
  %vm1524 = vweird.f32 %v1517
  %vm1525 = vmor %vm1523, %vm1524
  %v1526 = vsel %vm1525, %v1517, %v1522
  %v1527 = vrsqrt.pop %v1456
  %v1528 = vmul.f32 %v1527, %v1456
  %v1529 = vmul.f32 %v1528, %v1527
  %v1530 = vmul.f32 0.5, %v1529
  %v1531 = vsub.f32 1.5, %v1530
  %v1532 = vmul.f32 %v1527, %v1531
  %vm1533 = vweird.f32 %v1456
  %vm1534 = vweird.f32 %v1527
  %vm1535 = vmor %vm1533, %vm1534
  %v1536 = vsel %vm1535, %v1527, %v1532
  %v1537 = vmul.f32 %v1401, %v1466
  %v1538 = vmul.f32 %v1402, %v1476
  %v1539 = vmul.f32 %v1403, %v1486
  %v1540 = vmul.f32 %v1404, %v1496
  %v1541 = vmul.f32 %v1405, %v1506
  %v1542 = vmul.f32 %v1406, %v1516
  %v1543 = vmul.f32 %v1407, %v1526
  %v1544 = vmul.f32 %v1408, %v1536
  %v1545 = vperm.slane %v27, 6
  %v1546 = vmul.f32 %v1537, %v1545
  %v1547 = vmul.f32 %v1538, %v1545
  %v1548 = vmul.f32 %v1539, %v1545
  %v1549 = vmul.f32 %v1540, %v1545
  %v1550 = vmul.f32 %v1541, %v1545
  %v1551 = vmul.f32 %v1542, %v1545
  %v1552 = vmul.f32 %v1543, %v1545
  %v1553 = vmul.f32 %v1544, %v1545
  %v1554 = vperm.slane %v27, 7
  %v1555 = vadd.f32 %v1546, %v1554
  %v1556 = vadd.f32 %v1547, %v1554
  %v1557 = vadd.f32 %v1548, %v1554
  %v1558 = vadd.f32 %v1549, %v1554
  %v1559 = vadd.f32 %v1550, %v1554
  %v1560 = vadd.f32 %v1551, %v1554
  %v1561 = vadd.f32 %v1552, %v1554
  %v1562 = vadd.f32 %v1553, %v1554
  %v1563 = vpack.c.bf16 %v1555, %v1555
  %v1564 = vpack.c.bf16 %v1556, %v1556
  %v1565 = vpack.c.bf16 %v1557, %v1557
  %v1566 = vpack.c.bf16 %v1558, %v1558
  %v1567 = vpack.c.bf16 %v1559, %v1559
  %v1568 = vpack.c.bf16 %v1560, %v1560
  %v1569 = vpack.c.bf16 %v1561, %v1561
  %v1570 = vpack.c.bf16 %v1562, %v1562
  %vm1571 = vcmask 257024
  %1572 = vst.msk [vmem:[%s7] sm:$0xf] %vm1571, %v1563
  %1573 = vst.msk [vmem:[%s7 + $0x4] sm:$0xf] %vm1571, %v1564
  %1574 = vst.msk [vmem:[%s7 + $0x8] sm:$0xf] %vm1571, %v1565
  %1575 = vst.msk [vmem:[%s7 + $0xc] sm:$0xf] %vm1571, %v1566
  %1576 = vst.msk [vmem:[%s7 + $0x10] sm:$0xf] %vm1571, %v1567
  %1577 = vst.msk [vmem:[%s7 + $0x14] sm:$0xf] %vm1571, %v1568
  %1578 = vst.msk [vmem:[%s7 + $0x18] sm:$0xf] %vm1571, %v1569
  %1579 = vst.msk [vmem:[%s7 + $0x1c] sm:$0xf] %vm1571, %v1570
  // Predicated region
  $region30: #{residual_block_forward.2} parent=0 // pred_check
    _
  $region31: #{residual_block_forward.2} parent=0 // pred_check_branch
    %1581 = sbr.rel (0) target = $region33
  $region32: #{residual_block_forward.2} parent=0 // pred_region
    _
  $region33: #{residual_block_forward.2} parent=0 // pred_fallthru
    _
  // Predicated region
  $region34: #{residual_block_forward.2} parent=0 // pred_check
    _
  $region35: #{residual_block_forward.2} parent=0 // pred_check_branch
    %1583 = sbr.rel (0) target = $region37
  $region36: #{residual_block_forward.2} parent=0 // pred_region
    _
  $region37: #{residual_block_forward.2} parent=0 // pred_fallthru
    _

</llo_original>
